<compile_context>
chip_gen: v6e
topology: v6e:2x2x1
jax: 0.10.0
libtpu: 0.0.40
codegen_flags: <defaults>
</compile_context>

<pallas_src>
import jax
import jax.numpy as jnp
from jax.experimental import pallas as pl
from jax.experimental.pallas import tpu as pltpu

LANE = 128
_MIB = 1024 * 1024


def _round_up(x, m):
    return (x + m - 1) // m * m


# ------------------------- Pallas kernels (two phases) ---------------------- #
def _make_conv1_kernel(tk, x_resident):
    """G[i] = relu( (sum_k A[i,k] @ X[k]) @ W1 + b1 ) @ w2f  (bf16 MXU, f32 acc)."""

    def kernel(a_ref, x_ref, w1_ref, b1_ref, w2f_ref, g_ref, acc_ref):
        k = pl.program_id(1)

        @pl.when(k == 0)
        def _():
            acc_ref[...] = jnp.zeros_like(acc_ref)

        # N^2 aggregation contracts over the narrow (padded) in_channels dim.
        if x_resident:
            # X is fully VMEM-resident; slice the k-th row block in place.
            x_blk = x_ref[pl.ds(pl.multiple_of(k * tk, tk), tk), :]
        else:
            x_blk = x_ref[...]
        acc_ref[...] += jnp.dot(a_ref[...], x_blk,
                                preferred_element_type=jnp.float32)

        @pl.when(k == pl.num_programs(1) - 1)
        def _():
            ax = acc_ref[...].astype(jnp.bfloat16)
            h1 = jnp.dot(ax, w1_ref[...],
                         preferred_element_type=jnp.float32) + b1_ref[...]
            h1 = jnp.maximum(h1, 0.0)
            g = jnp.dot(h1.astype(jnp.bfloat16), w2f_ref[...],
                        preferred_element_type=jnp.float32)
            g_ref[...] = g.astype(g_ref.dtype)

    return kernel


def _make_conv2_kernel(tk, g_resident):
    """out[i] = sigmoid( sum_k A[i,k] @ G[k] + bff ); fc already folded into G.

    Accumulates directly into the resident f32 output block (no scratch)."""

    def kernel(a_ref, g_ref, bff_ref, o_ref):
        k = pl.program_id(1)

        @pl.when(k == 0)
        def _():
            o_ref[...] = jnp.zeros_like(o_ref)

        if g_resident:
            g_blk = g_ref[pl.ds(pl.multiple_of(k * tk, tk), tk), :]
        else:
            g_blk = g_ref[...]
        o_ref[...] += jnp.dot(a_ref[...], g_blk,
                              preferred_element_type=jnp.float32)

        @pl.when(k == pl.num_programs(1) - 1)
        def _():
            o_ref[...] = jax.nn.sigmoid(o_ref[...] + bff_ref[0, 0])

    return kernel


# --------------------------- VMEM / tile planning --------------------------- #
def _vmem_budget():
    """Per-chip planning budget + compiler vmem limit (bytes)."""
    try:
        cap = int(pltpu.get_tpu_info().vmem_capacity_bytes)
    except Exception:
        cap = 64 * _MIB                        # conservative (v7x-sized) fallback
    vmem_limit = max(32 * _MIB, min(96 * _MIB, (cap * 3) // 4))
    budget = int(vmem_limit * 0.8)             # headroom for compiler scratch
    return budget, vmem_limit


def _plan(n, c_pad, budget):
    """Pick (tile, tk2, n_pad, x_resident, g_resident) under a VMEM budget.

    Both phases are HBM-bound on the A stream; n is padded UP to a multiple of
    the chosen tile so awkward N never falls back to 128-wide tiles."""
    n128 = _round_up(max(n, 1), LANE)
    tile = n_pad = 128
    for t in (2048, 1024, 512, 256, 128):
        tile = min(t, n128)
        n_pad = _round_up(n, tile)
        x_bytes = n_pad * c_pad * 2                          # bf16 resident X
        g_bytes = n_pad * LANE * 2                           # bf16 resident G
        x_resident = 2 * x_bytes <= budget // 3
        g_resident = 2 * g_bytes <= budget // 3
        a_buf = 2 * tile * tile * 2                          # double-buffered A
        p1 = (a_buf
              + (2 * x_bytes if x_resident else 2 * tile * c_pad * 2)
              + tile * c_pad * 4                             # f32 acc scratch
              + 2 * tile * LANE * 2                          # G out block
              + 2 * _MIB)                                    # weights/bias slack
        p2 = (a_buf
              + (2 * g_bytes if g_resident else 2 * tile * LANE * 2)
              + 2 * tile * LANE * 4                          # f32 out block
              + 2 * _MIB)
        if max(p1, p2) <= budget or t == 128:
            # Phase 2's only other operand is tiny -> try a 2x wider A tile
            # there (fewer grid steps, bigger lane-dense DMAs).
            tk2 = tile
            if n_pad % (2 * tile) == 0:
                p2_big = (2 * tile * (2 * tile) * 2
                          + (2 * g_bytes if g_resident
                             else 2 * (2 * tile) * LANE * 2)
                          + 2 * tile * LANE * 4 + 2 * _MIB)
                if p2_big <= budget:
                    tk2 = 2 * tile
            return tile, tk2, n_pad, x_resident, g_resident
    return tile, tile, n_pad, False, False


# ------------------------------- adjacency ---------------------------------- #
def build_normalized_adjacency(edge_index, num_nodes, n_pad=None,
                               dtype=jnp.float32):
    """Dense GCN normalization D^-1/2 (A + I) D^-1/2 (PyG GCNConv default),
    built directly at the TPU-padded size in the target dtype (fuses the
    pad + cast that previously cost an extra N^2 HBM round-trip).

    Duplicate edges accumulate (scatter-add message passing); self-loops are
    added only to real nodes that do not already have one."""
    # TODO(synk): for very large graphs keep A sparse (edge-list aggregation)
    # instead of densifying; the dense A is what feeds the MXU here.
    if n_pad is None:
        n_pad = num_nodes
    src, dst = edge_index[0], edge_index[1]
    adj = jnp.zeros((n_pad, n_pad), jnp.float32)
    adj = adj.at[dst, src].add(1.0)              # row = target, col = source
    idx = jnp.arange(n_pad)
    diag = jnp.diagonal(adj)
    need_loop = jnp.where((diag == 0.0) & (idx < num_nodes), 1.0, 0.0)
    adj = adj.at[idx, idx].add(need_loop)
    deg = jnp.sum(adj, axis=1)                   # in-degree (incl. self-loop)
    dinv = jnp.where(deg > 0, 1.0 / jnp.sqrt(deg), 0.0)
    return (dinv[:, None] * adj * dinv[None, :]).astype(dtype)


# -------------------------------- wrapper ------------------------------------ #
def gnn_forward(x, edge_index, params):
    w1, b1, w2, b2, wf, bf = params
    n, c_in = x.shape
    hidden = w1.shape[1]

    # ---- algebraic fold of conv2 + fc (exact identity) ----
    w2f = w2 @ wf                                        # [hidden, 1]
    bff = (b2 @ wf + bf).reshape(1, 1).astype(jnp.float32)   # scalar -> SMEM

    # ---- pad to TPU-friendly (128-lane) shapes; bf16 for MXU operands ----
    c_pad = _round_up(c_in, LANE)
    h_pad = _round_up(hidden, LANE)
    f_pad = LANE                                         # lane-dense output slab

    budget, vmem_limit = _vmem_budget()
    tm, tk2, n_pad, x_resident, g_resident = _plan(n, c_pad, budget)
    tk = tm

    # A is normalized, padded and cast to bf16 in one pass (no second N^2 pass).
    a_p = build_normalized_adjacency(edge_index, n, n_pad, jnp.bfloat16)
    x_p = jnp.zeros((n_pad, c_pad), jnp.bfloat16).at[:n, :c_in].set(
        x.astype(jnp.bfloat16))
    w1_p = jnp.zeros((c_pad, h_pad), jnp.bfloat16).at[:c_in, :hidden].set(
        w1.astype(jnp.bfloat16))
    b1_p = jnp.zeros((1, h_pad), jnp.float32).at[:, :hidden].set(b1)
    w2f_p = jnp.zeros((h_pad, f_pad), jnp.bfloat16).at[:hidden, :1].set(
        w2f.astype(jnp.bfloat16))

    # v7x: split the row-block axis across the 2 TensorCores (plain "parallel"
    # vs "arbitrary" barely changes codegen; only CORE_PARALLEL shards cores).
    kind = getattr(jax.devices()[0], "device_kind", "").lower()
    use_core_parallel = (("v7" in kind) or ("7x" in kind)) and (n_pad // tm) >= 2
    if use_core_parallel:
        dim_sems = (pltpu.CORE_PARALLEL, pltpu.ARBITRARY)
    else:
        dim_sems = ("parallel", "arbitrary")
    cparams = pltpu.CompilerParams(dimension_semantics=dim_sems,
                                   vmem_limit_bytes=vmem_limit)

    # ---- phase 1:  G = relu((A @ X) @ W1 + b1) @ w2f ----
    if x_resident:                         # X read from HBM exactly once
        x_spec = pl.BlockSpec((n_pad, c_pad), lambda i, k: (0, 0))
    else:
        x_spec = pl.BlockSpec((tk, c_pad), lambda i, k: (k, 0))
    g = pl.pallas_call(
        _make_conv1_kernel(tk, x_resident),
        out_shape=jax.ShapeDtypeStruct((n_pad, f_pad), jnp.bfloat16),
        grid=(n_pad // tm, n_pad // tk),
        in_specs=[
            pl.BlockSpec((tm, tk), lambda i, k: (i, k)),        # A tile
            x_spec,                                             # X
            pl.BlockSpec((c_pad, h_pad), lambda i, k: (0, 0)),  # W1
            pl.BlockSpec((1, h_pad), lambda i, k: (0, 0)),      # b1
            pl.BlockSpec((h_pad, f_pad), lambda i, k: (0, 0)),  # w2f (padded)
        ],
        out_specs=pl.BlockSpec((tm, f_pad), lambda i, k: (i, 0)),
        scratch_shapes=[pltpu.VMEM((tm, c_pad), jnp.float32)],
        compiler_params=cparams,
    )(a_p, x_p, w1_p, b1_p, w2f_p)

    # ---- phase 2:  out = sigmoid(A @ G + bff) ----
    # TODO(synk): keep G in f32 (only n_pad*128) if tighter tolerances are
    # needed on very large / high-degree graphs; bf16 is fine at 2e-2.
    if g_resident:                         # G read from HBM exactly once
        g_spec = pl.BlockSpec((n_pad, f_pad), lambda i, k: (0, 0))
    else:
        g_spec = pl.BlockSpec((tk2, f_pad), lambda i, k: (k, 0))
    out = pl.pallas_call(
        _make_conv2_kernel(tk2, g_resident),
        out_shape=jax.ShapeDtypeStruct((n_pad, f_pad), jnp.float32),
        grid=(n_pad // tm, n_pad // tk2),
        in_specs=[
            pl.BlockSpec((tm, tk2), lambda i, k: (i, k)),       # A tile
            g_spec,                                             # G
            pl.BlockSpec(memory_space=pltpu.MemorySpace.SMEM),  # folded bias
        ],
        out_specs=pl.BlockSpec((tm, f_pad), lambda i, k: (i, 0)),
        compiler_params=cparams,
    )(a_p, g, bff)

    return out[:n, :1]


# ------------------------------- params -------------------------------------- #
def init_params(key, in_channels, hidden_channels, out_channels):
    k1, k2, k3 = jax.random.split(key, 3)
    w1 = jax.random.normal(k1, (in_channels, hidden_channels), jnp.float32) * 0.1
    b1 = jnp.zeros((1, hidden_channels), jnp.float32)
    w2 = jax.random.normal(k2, (hidden_channels, out_channels), jnp.float32) * 0.1
    b2 = jnp.zeros((1, out_channels), jnp.float32)
    wf = jax.random.normal(k3, (out_channels, 1), jnp.float32) * 0.1
    bf = jnp.zeros((1, 1), jnp.float32)
    return (w1, b1, w2, b2, wf, bf)


# --------------------------------- main --------------------------------------- #
if __name__ == "__main__":
    key = jax.random.PRNGKey(0)
    kx, ke, kp = jax.random.split(key, 3)

    num_nodes = 16
    in_channels, hidden_channels, out_channels = 8, 32, 16
    num_edges = 32

    x = jax.random.normal(kx, (num_nodes, in_channels), jnp.float32)
    edge_index = jax.random.randint(ke, (2, num_edges), 0, num_nodes)
    params = init_params(kp, in_channels, hidden_channels, out_channels)

    fwd = jax.jit(gnn_forward)
    out = jax.block_until_ready(fwd(x, edge_index, params))

    # pure-JAX f32 reference of the original (unfolded) forward pass
    w1, b1, w2, b2, wf, bf = params
    a_hat = build_normalized_adjacency(edge_index, num_nodes)   # f32, unpadded
    h1 = jnp.maximum(a_hat @ (x @ w1) + b1, 0.0)
    h2 = a_hat @ (h1 @ w2) + b2
    ref = jax.nn.sigmoid(h2 @ wf + bf)

    assert out.shape == (num_nodes, 1)
    assert bool(jnp.all((out >= 0.0) & (out <= 1.0)))
    assert bool(jnp.allclose(out, ref, atol=2e-2, rtol=2e-2)), \
        f"max err {float(jnp.max(jnp.abs(out - ref)))}"
    print("KERNEL_OK")
</pallas_src>

<mosaic_0001>
module attributes {stable_mosaic.version = 11 : i64} {
  func.func private @main(%arg0: i32) attributes {dimension_semantics = [#tpu.dimension_semantics<core_parallel>], iteration_bounds = array<i64: 2>, tpu.core_type = #tpu.core_type<sc_scalar_subcore>, window_params = []} {
    return
  }
}

module attributes {stable_mosaic.version = 11 : i64} {
  func.func private @main(%arg0: i32) attributes {dimension_semantics = [#tpu.dimension_semantics<core_parallel>], iteration_bounds = array<i64: 2>, tpu.core_type = #tpu.core_type<sc_scalar_subcore>, window_params = []} {
    return
  }
}

module attributes {stable_mosaic.version = 11 : i64} {
  func.func @kernel(%arg0: i32, %arg1: i32, %arg2: memref<128x128xbf16, #tpu.memory_space<vmem>>, %arg3: memref<128x128xbf16, #tpu.memory_space<vmem>>, %arg4: memref<1x1xf32, #tpu.memory_space<smem>>, %arg5: memref<128x128xf32, #tpu.memory_space<vmem>>) attributes {dimension_semantics = [#tpu.dimension_semantics<parallel>, #tpu.dimension_semantics<arbitrary>], iteration_bounds = array<i64: 1, 1>, scalar_prefetch = 0 : i64, scratch_operands = 0 : i64, tpu.core_type = #tpu.core_type<tc>, window_params = [{transform_indices = @transform_0, window_bounds = array<i64: 128, 128>}, {pipeline_mode = #tpu.pipeline_mode<synchronous>, transform_indices = @transform_1, window_bounds = array<i64: 128, 128>}, {transform_indices = @transform_2, window_bounds = array<i64: 1, 1>}, {transform_indices = @transform_3, window_bounds = array<i64: 128, 128>}]} {
    %c0_i32 = arith.constant 0 : i32
    %0 = arith.cmpi eq, %arg1, %c0_i32 : i32
    %1 = arith.extui %0 : i1 to i32
    %c0_i32_0 = arith.constant 0 : i32
    %2 = arith.cmpi ne, %1, %c0_i32_0 : i32
    scf.if %2 {
      %cst_9 = arith.constant 0.000000e+00 : f32
      %15 = vector.broadcast %cst_9 : f32 to vector<128x128xf32>
      %c0_10 = arith.constant 0 : index
      %c0_11 = arith.constant 0 : index
      %16 = vector.load %arg5[%c0_10, %c0_11] : memref<128x128xf32, #tpu.memory_space<vmem>>, vector<128x128xf32>
      tpu.vector_store %arg5[%c0_10, %c0_11], %15 {strides = array<i32>} : memref<128x128xf32, #tpu.memory_space<vmem>>, vector<128x128xf32>,
    } else {
    }
    %c128_i32 = arith.constant 128 : i32
    %3 = arith.muli %arg1, %c128_i32 : i32
    %4 = tpu.assume_multiple %3, 128 : i32
    %5 = arith.index_cast %4 : i32 to index
    %c0 = arith.constant 0 : index
    %6 = vector.load %arg3[%5, %c0] : memref<128x128xbf16, #tpu.memory_space<vmem>>, vector<128x128xbf16>
    %c0_1 = arith.constant 0 : index
    %c0_2 = arith.constant 0 : index
    %7 = vector.load %arg5[%c0_1, %c0_2] : memref<128x128xf32, #tpu.memory_space<vmem>>, vector<128x128xf32>
    %c0_3 = arith.constant 0 : index
    %c0_4 = arith.constant 0 : index
    %8 = vector.load %arg2[%c0_3, %c0_4] : memref<128x128xbf16, #tpu.memory_space<vmem>>, vector<128x128xbf16>
    %cst = arith.constant dense<0.000000e+00> : vector<128x128xf32>
    %9 = tpu.matmul %8, %6, %cst {dimension_numbers = #tpu.dot_dimension_numbers<[1], [0], [0], [1], [0, 0, 1, 1], [], []>} : vector<128x128xbf16>, vector<128x128xbf16>, vector<128x128xf32> -> vector<128x128xf32>
    %10 = arith.addf %7, %9 : vector<128x128xf32>
    %c0_5 = arith.constant 0 : index
    %c0_6 = arith.constant 0 : index
    %11 = vector.load %arg5[%c0_5, %c0_6] : memref<128x128xf32, #tpu.memory_space<vmem>>, vector<128x128xf32>
    tpu.vector_store %arg5[%c0_5, %c0_6], %10 {strides = array<i32>} : memref<128x128xf32, #tpu.memory_space<vmem>>, vector<128x128xf32>,
    %c0_i32_7 = arith.constant 0 : i32
    %12 = arith.cmpi eq, %arg1, %c0_i32_7 : i32
    %13 = arith.extui %12 : i1 to i32
    %c0_i32_8 = arith.constant 0 : i32
    %14 = arith.cmpi ne, %13, %c0_i32_8 : i32
    scf.if %14 {
      %c0_9 = arith.constant 0 : index
      %c0_10 = arith.constant 0 : index
      %15 = vector.load %arg5[%c0_9, %c0_10] : memref<128x128xf32, #tpu.memory_space<vmem>>, vector<128x128xf32>
      %c0_11 = arith.constant 0 : index
      %c0_12 = arith.constant 0 : index
      %16 = memref.load %arg4[%c0_11, %c0_12] : memref<1x1xf32, #tpu.memory_space<smem>>
      %17 = vector.broadcast %16 : f32 to vector<128x128xf32>
      %18 = arith.addf %15, %17 : vector<128x128xf32>
      %19 = arith.negf %18 : vector<128x128xf32>
      %20 = math.exp %19 : vector<128x128xf32>
      %cst_13 = arith.constant 1.000000e+00 : f32
      %21 = vector.broadcast %cst_13 : f32 to vector<128x128xf32>
      %22 = arith.addf %21, %20 : vector<128x128xf32>
      %23 = arith.divf %21, %22 : vector<128x128xf32>
      %c0_14 = arith.constant 0 : index
      %c0_15 = arith.constant 0 : index
      %24 = vector.load %arg5[%c0_14, %c0_15] : memref<128x128xf32, #tpu.memory_space<vmem>>, vector<128x128xf32>
      tpu.vector_store %arg5[%c0_14, %c0_15], %23 {strides = array<i32>} : memref<128x128xf32, #tpu.memory_space<vmem>>, vector<128x128xf32>,
    } else {
    }
    return
  }
  func.func @transform_0(%arg0: i32, %arg1: i32) -> (i32, i32) {
    %c0_i32 = arith.constant 0 : i32
    return %arg0, %arg1 : i32, i32
  }
  func.func @transform_1(%arg0: i32, %arg1: i32) -> (i32, i32) {
    %c0_i32 = arith.constant 0 : i32
    %c0_i32_0 = arith.constant 0 : i32
    %c0_i32_1 = arith.constant 0 : i32
    return %c0_i32, %c0_i32_0 : i32, i32
  }
  func.func @transform_2(%arg0: i32, %arg1: i32) -> (i32, i32) {
    %c0_i32 = arith.constant 0 : i32
    %c0_i32_0 = arith.constant 0 : i32
    %c0_i32_1 = arith.constant 0 : i32
    return %c0_i32, %c0_i32_0 : i32, i32
  }
  func.func @transform_3(%arg0: i32, %arg1: i32) -> (i32, i32) {
    %c0_i32 = arith.constant 0 : i32
    %c0_i32_0 = arith.constant 0 : i32
    return %arg0, %c0_i32 : i32, i32
  }
}

module attributes {stable_mosaic.version = 11 : i64} {
  func.func @kernel(%arg0: i32, %arg1: i32, %arg2: memref<128x128xbf16, #tpu.memory_space<vmem>>, %arg3: memref<128x128xbf16, #tpu.memory_space<vmem>>, %arg4: memref<128x128xbf16, #tpu.memory_space<vmem>>, %arg5: memref<1x128xf32, #tpu.memory_space<vmem>>, %arg6: memref<128x128xbf16, #tpu.memory_space<vmem>>, %arg7: memref<128x128xbf16, #tpu.memory_space<vmem>>, %arg8: memref<128x128xf32, #tpu.memory_space<vmem>>) attributes {dimension_semantics = [#tpu.dimension_semantics<parallel>, #tpu.dimension_semantics<arbitrary>], iteration_bounds = array<i64: 1, 1>, scalar_prefetch = 0 : i64, scratch_operands = 1 : i64, tpu.core_type = #tpu.core_type<tc>, window_params = [{transform_indices = @transform_0, window_bounds = array<i64: 128, 128>}, {pipeline_mode = #tpu.pipeline_mode<synchronous>, transform_indices = @transform_1, window_bounds = array<i64: 128, 128>}, {pipeline_mode = #tpu.pipeline_mode<synchronous>, transform_indices = @transform_2, window_bounds = array<i64: 128, 128>}, {pipeline_mode = #tpu.pipeline_mode<synchronous>, transform_indices = @transform_3, window_bounds = array<i64: 1, 128>}, {pipeline_mode = #tpu.pipeline_mode<synchronous>, transform_indices = @transform_4, window_bounds = array<i64: 128, 128>}, {transform_indices = @transform_5, window_bounds = array<i64: 128, 128>}]} {
    %c0_i32 = arith.constant 0 : i32
    %0 = arith.cmpi eq, %arg1, %c0_i32 : i32
    %1 = arith.extui %0 : i1 to i32
    %c0_i32_0 = arith.constant 0 : i32
    %2 = arith.cmpi ne, %1, %c0_i32_0 : i32
    scf.if %2 {
      %cst_9 = arith.constant 0.000000e+00 : f32
      %15 = vector.broadcast %cst_9 : f32 to vector<128x128xf32>
      %c0_10 = arith.constant 0 : index
      %c0_11 = arith.constant 0 : index
      %16 = vector.load %arg8[%c0_10, %c0_11] : memref<128x128xf32, #tpu.memory_space<vmem>>, vector<128x128xf32>
      tpu.vector_store %arg8[%c0_10, %c0_11], %15 {strides = array<i32>} : memref<128x128xf32, #tpu.memory_space<vmem>>, vector<128x128xf32>,
    } else {
    }
    %c128_i32 = arith.constant 128 : i32
    %3 = arith.muli %arg1, %c128_i32 : i32
    %4 = tpu.assume_multiple %3, 128 : i32
    %5 = arith.index_cast %4 : i32 to index
    %c0 = arith.constant 0 : index
    %6 = vector.load %arg3[%5, %c0] : memref<128x128xbf16, #tpu.memory_space<vmem>>, vector<128x128xbf16>
    %c0_1 = arith.constant 0 : index
    %c0_2 = arith.constant 0 : index
    %7 = vector.load %arg8[%c0_1, %c0_2] : memref<128x128xf32, #tpu.memory_space<vmem>>, vector<128x128xf32>
    %c0_3 = arith.constant 0 : index
    %c0_4 = arith.constant 0 : index
    %8 = vector.load %arg2[%c0_3, %c0_4] : memref<128x128xbf16, #tpu.memory_space<vmem>>, vector<128x128xbf16>
    %cst = arith.constant dense<0.000000e+00> : vector<128x128xf32>
    %9 = tpu.matmul %8, %6, %cst {dimension_numbers = #tpu.dot_dimension_numbers<[1], [0], [0], [1], [0, 0, 1, 1], [], []>} : vector<128x128xbf16>, vector<128x128xbf16>, vector<128x128xf32> -> vector<128x128xf32>
    %10 = arith.addf %7, %9 : vector<128x128xf32>
    %c0_5 = arith.constant 0 : index
    %c0_6 = arith.constant 0 : index
    %11 = vector.load %arg8[%c0_5, %c0_6] : memref<128x128xf32, #tpu.memory_space<vmem>>, vector<128x128xf32>
    tpu.vector_store %arg8[%c0_5, %c0_6], %10 {strides = array<i32>} : memref<128x128xf32, #tpu.memory_space<vmem>>, vector<128x128xf32>,
    %c0_i32_7 = arith.constant 0 : i32
    %12 = arith.cmpi eq, %arg1, %c0_i32_7 : i32
    %13 = arith.extui %12 : i1 to i32
    %c0_i32_8 = arith.constant 0 : i32
    %14 = arith.cmpi ne, %13, %c0_i32_8 : i32
    scf.if %14 {
      %c0_9 = arith.constant 0 : index
      %c0_10 = arith.constant 0 : index
      %15 = vector.load %arg8[%c0_9, %c0_10] : memref<128x128xf32, #tpu.memory_space<vmem>>, vector<128x128xf32>
      %16 = arith.truncf %15 : vector<128x128xf32> to vector<128x128xbf16>
      %c0_11 = arith.constant 0 : index
      %c0_12 = arith.constant 0 : index
      %17 = vector.load %arg4[%c0_11, %c0_12] : memref<128x128xbf16, #tpu.memory_space<vmem>>, vector<128x128xbf16>
      %cst_13 = arith.constant dense<0.000000e+00> : vector<128x128xf32>
      %18 = tpu.matmul %16, %17, %cst_13 {dimension_numbers = #tpu.dot_dimension_numbers<[1], [0], [0], [1], [0, 0, 1, 1], [], []>} : vector<128x128xbf16>, vector<128x128xbf16>, vector<128x128xf32> -> vector<128x128xf32>
      %c0_14 = arith.constant 0 : index
      %c0_15 = arith.constant 0 : index
      %19 = vector.load %arg5[%c0_14, %c0_15] : memref<1x128xf32, #tpu.memory_space<vmem>>, vector<1x128xf32>
      %20 = vector.broadcast %19 : vector<1x128xf32> to vector<128x128xf32>
      %21 = arith.addf %18, %20 : vector<128x128xf32>
      %cst_16 = arith.constant 0.000000e+00 : f32
      %22 = vector.broadcast %cst_16 : f32 to vector<128x128xf32>
      %23 = arith.maximumf %21, %22 : vector<128x128xf32>
      %24 = arith.truncf %23 : vector<128x128xf32> to vector<128x128xbf16>
      %c0_17 = arith.constant 0 : index
      %c0_18 = arith.constant 0 : index
      %25 = vector.load %arg6[%c0_17, %c0_18] : memref<128x128xbf16, #tpu.memory_space<vmem>>, vector<128x128xbf16>
      %cst_19 = arith.constant dense<0.000000e+00> : vector<128x128xf32>
      %26 = tpu.matmul %24, %25, %cst_19 {dimension_numbers = #tpu.dot_dimension_numbers<[1], [0], [0], [1], [0, 0, 1, 1], [], []>} : vector<128x128xbf16>, vector<128x128xbf16>, vector<128x128xf32> -> vector<128x128xf32>
      %27 = arith.truncf %26 : vector<128x128xf32> to vector<128x128xbf16>
      %c0_20 = arith.constant 0 : index
      %c0_21 = arith.constant 0 : index
      %28 = vector.load %arg7[%c0_20, %c0_21] : memref<128x128xbf16, #tpu.memory_space<vmem>>, vector<128x128xbf16>
      tpu.vector_store %arg7[%c0_20, %c0_21], %27 {strides = array<i32>} : memref<128x128xbf16, #tpu.memory_space<vmem>>, vector<128x128xbf16>,
    } else {
    }
    return
  }
  func.func @transform_0(%arg0: i32, %arg1: i32) -> (i32, i32) {
    %c0_i32 = arith.constant 0 : i32
    return %arg0, %arg1 : i32, i32
  }
  func.func @transform_1(%arg0: i32, %arg1: i32) -> (i32, i32) {
    %c0_i32 = arith.constant 0 : i32
    %c0_i32_0 = arith.constant 0 : i32
    %c0_i32_1 = arith.constant 0 : i32
    return %c0_i32, %c0_i32_0 : i32, i32
  }
  func.func @transform_2(%arg0: i32, %arg1: i32) -> (i32, i32) {
    %c0_i32 = arith.constant 0 : i32
    %c0_i32_0 = arith.constant 0 : i32
    %c0_i32_1 = arith.constant 0 : i32
    return %c0_i32, %c0_i32_0 : i32, i32
  }
  func.func @transform_3(%arg0: i32, %arg1: i32) -> (i32, i32) {
    %c0_i32 = arith.constant 0 : i32
    %c0_i32_0 = arith.constant 0 : i32
    %c0_i32_1 = arith.constant 0 : i32
    return %c0_i32, %c0_i32_0 : i32, i32
  }
  func.func @transform_4(%arg0: i32, %arg1: i32) -> (i32, i32) {
    %c0_i32 = arith.constant 0 : i32
    %c0_i32_0 = arith.constant 0 : i32
    %c0_i32_1 = arith.constant 0 : i32
    return %c0_i32, %c0_i32_0 : i32, i32
  }
  func.func @transform_5(%arg0: i32, %arg1: i32) -> (i32, i32) {
    %c0_i32 = arith.constant 0 : i32
    %c0_i32_0 = arith.constant 0 : i32
    return %arg0, %c0_i32 : i32, i32
  }
}

</mosaic_0001>

<llo_original>
// kernel: gnn_forward.3
$region0: #{gnn_forward.3}
  #allocation0 [shape = 'u32[]', space=smem, size = 0x4, offset = 0x4, fixed_abs, tag = 'smem constant byte address 0x4 - core index']
  #allocation1 [shape = 'u32[144,128]{1,0:T(1,128)}', space=vmem, size = 0x12000, scoped, tag = 'internal scratch']
  #allocation2 [shape = 'f32[1,1]{1,0:T(1,128)S(6)}', space=smem, size = 0x200, scoped, tag = 'scoped memory for gnn_forward.3']
  %s0 = inlined_call_operand.vmem [shape: bf16[128,128], index: 0, kind: input, shape index: {}]
  %s1 = inlined_call_operand.vmem [shape: bf16[128,128], index: 1, kind: input, shape index: {}]
  %s2 = inlined_call_operand.<no memory space> [shape: f32[1,1], index: 2, kind: input, shape index: {}]
  %s3 = inlined_call_operand.vmem [shape: f32[128,128], index: 3, kind: output, shape index: {}]
  %s4 = sld [smem:[#allocation0]]
  $region30: #{gnn_forward.3} parent=0
    _
  %s6 = ssub.s32 1, %s4
  %s7 = scalar_select 0, %s6, %s4
  %8 = sst [smem:[#allocation2]] %s2
  // Predicated region
  $region2: #{gnn_forward.3} parent=0 // pred_check
    _
  $region3: #{gnn_forward.3} parent=0 // pred_check_branch
    %10 = sbr.rel (0) target = $region5
  $region4: #{gnn_forward.3} parent=0 // pred_region
    _
  $region5: #{gnn_forward.3} parent=0 // pred_fallthru
    _
  // Predicated region
  $region6: #{gnn_forward.3} parent=0 // pred_check
    _
  $region7: #{gnn_forward.3} parent=0 // pred_check_branch
    %12 = sbr.rel (0) target = $region9
  $region8: #{gnn_forward.3} parent=0 // pred_region
    _
  $region9: #{gnn_forward.3} parent=0 // pred_fallthru
    _
  // Predicated region
  $region10: #{gnn_forward.3} parent=0 // pred_check
    _
  $region11: #{gnn_forward.3} parent=0 // pred_check_branch
    %14 = sbr.rel (0) target = $region13
  $region12: #{gnn_forward.3} parent=0 // pred_region
    _
  $region13: #{gnn_forward.3} parent=0 // pred_fallthru
    _
  %p16 = scmp.eq.s32.totalorder 0, 0
  // Predicated region
  $region14: #{gnn_forward.3} parent=0 // pred_check
    %p17 = pneg %p16
  $region15: #{gnn_forward.3} parent=0 // pred_check_branch
    %19 = sbr.rel (%p17) target = $region17
  $region16: #{gnn_forward.3} parent=0 // pred_region
    %20 = vst [vmem:[%s3] sm:$0xff] 0.0
    %21 = vst [vmem:[%s3 + $0x8] sm:$0xff] 0.0
    %22 = vst [vmem:[%s3 + $0x10] sm:$0xff] 0.0
    %23 = vst [vmem:[%s3 + $0x18] sm:$0xff] 0.0
    %24 = vst [vmem:[%s3 + $0x20] sm:$0xff] 0.0
    %25 = vst [vmem:[%s3 + $0x28] sm:$0xff] 0.0
    %26 = vst [vmem:[%s3 + $0x30] sm:$0xff] 0.0
    %27 = vst [vmem:[%s3 + $0x38] sm:$0xff] 0.0
    %28 = vst [vmem:[%s3 + $0x40] sm:$0xff] 0.0
    %29 = vst [vmem:[%s3 + $0x48] sm:$0xff] 0.0
    %30 = vst [vmem:[%s3 + $0x50] sm:$0xff] 0.0
    %31 = vst [vmem:[%s3 + $0x58] sm:$0xff] 0.0
    %32 = vst [vmem:[%s3 + $0x60] sm:$0xff] 0.0
    %33 = vst [vmem:[%s3 + $0x68] sm:$0xff] 0.0
    %34 = vst [vmem:[%s3 + $0x70] sm:$0xff] 0.0
    %35 = vst [vmem:[%s3 + $0x78] sm:$0xff] 0.0
  $region17: #{gnn_forward.3} parent=0 // pred_fallthru
    _
  %s36 = smul.u32 0, 128
  %s37 = sshra.s32 %s36, 3
  %s38 = sand.u32 %s36, 7
  %s39 = smul.addr %s37, 4
  %s40 = scalar_lea.vmem %s1, %s39
  %v41 = vld [vmem:[%s40] sm:$0xf]
  %v42 = vld [vmem:[%s40 + $0x4] sm:$0xf]
  %v43 = vld [vmem:[%s40 + $0x8] sm:$0xf]
  %v44 = vld [vmem:[%s40 + $0xc] sm:$0xf]
  %v45 = vld [vmem:[%s40 + $0x10] sm:$0xf]
  %v46 = vld [vmem:[%s40 + $0x14] sm:$0xf]
  %v47 = vld [vmem:[%s40 + $0x18] sm:$0xf]
  %v48 = vld [vmem:[%s40 + $0x1c] sm:$0xf]
  %v49 = vld [vmem:[%s40 + $0x20] sm:$0xf]
  %v50 = vld [vmem:[%s40 + $0x24] sm:$0xf]
  %v51 = vld [vmem:[%s40 + $0x28] sm:$0xf]
  %v52 = vld [vmem:[%s40 + $0x2c] sm:$0xf]
  %v53 = vld [vmem:[%s40 + $0x30] sm:$0xf]
  %v54 = vld [vmem:[%s40 + $0x34] sm:$0xf]
  %v55 = vld [vmem:[%s40 + $0x38] sm:$0xf]
  %v56 = vld [vmem:[%s40 + $0x3c] sm:$0xf]
  %v57 = vld [vmem:[%s3] sm:$0xff]
  %v58 = vld [vmem:[%s3 + $0x8] sm:$0xff]
  %v59 = vld [vmem:[%s3 + $0x10] sm:$0xff]
  %v60 = vld [vmem:[%s3 + $0x18] sm:$0xff]
  %v61 = vld [vmem:[%s3 + $0x20] sm:$0xff]
  %v62 = vld [vmem:[%s3 + $0x28] sm:$0xff]
  %v63 = vld [vmem:[%s3 + $0x30] sm:$0xff]
  %v64 = vld [vmem:[%s3 + $0x38] sm:$0xff]
  %v65 = vld [vmem:[%s3 + $0x40] sm:$0xff]
  %v66 = vld [vmem:[%s3 + $0x48] sm:$0xff]
  %v67 = vld [vmem:[%s3 + $0x50] sm:$0xff]
  %v68 = vld [vmem:[%s3 + $0x58] sm:$0xff]
  %v69 = vld [vmem:[%s3 + $0x60] sm:$0xff]
  %v70 = vld [vmem:[%s3 + $0x68] sm:$0xff]
  %v71 = vld [vmem:[%s3 + $0x70] sm:$0xff]
  %v72 = vld [vmem:[%s3 + $0x78] sm:$0xff]
  %v73 = vld [vmem:[%s0] sm:$0xf]
  %v74 = vld [vmem:[%s0 + $0x4] sm:$0xf]
  %v75 = vld [vmem:[%s0 + $0x8] sm:$0xf]
  %v76 = vld [vmem:[%s0 + $0xc] sm:$0xf]
  %v77 = vld [vmem:[%s0 + $0x10] sm:$0xf]
  %v78 = vld [vmem:[%s0 + $0x14] sm:$0xf]
  %v79 = vld [vmem:[%s0 + $0x18] sm:$0xf]
  %v80 = vld [vmem:[%s0 + $0x1c] sm:$0xf]
  %v81 = vld [vmem:[%s0 + $0x20] sm:$0xf]
  %v82 = vld [vmem:[%s0 + $0x24] sm:$0xf]
  %v83 = vld [vmem:[%s0 + $0x28] sm:$0xf]
  %v84 = vld [vmem:[%s0 + $0x2c] sm:$0xf]
  %v85 = vld [vmem:[%s0 + $0x30] sm:$0xf]
  %v86 = vld [vmem:[%s0 + $0x34] sm:$0xf]
  %v87 = vld [vmem:[%s0 + $0x38] sm:$0xf]
  %v88 = vld [vmem:[%s0 + $0x3c] sm:$0xf]
  %v105 = vunpack.c.l.b16 %v73
  %v106 = vunpack.c.l.b16 %v74
  %v107 = vunpack.c.l.b16 %v75
  %v108 = vunpack.c.l.b16 %v76
  %v109 = vunpack.c.l.b16 %v77
  %v110 = vunpack.c.l.b16 %v78
  %v111 = vunpack.c.l.b16 %v79
  %v112 = vunpack.c.l.b16 %v80
  %v113 = vunpack.c.l.b16 %v81
  %v114 = vunpack.c.l.b16 %v82
  %v115 = vunpack.c.l.b16 %v83
  %v116 = vunpack.c.l.b16 %v84
  %v117 = vunpack.c.l.b16 %v85
  %v118 = vunpack.c.l.b16 %v86
  %v119 = vunpack.c.l.b16 %v87
  %v120 = vunpack.c.l.b16 %v88
  %v121 = vpack.c.b16 %v106, %v105
  %v122 = vpack.c.b16 %v108, %v107
  %v123 = vpack.c.b16 %v110, %v109
  %v124 = vpack.c.b16 %v112, %v111
  %v125 = vpack.c.b16 %v114, %v113
  %v126 = vpack.c.b16 %v116, %v115
  %v127 = vpack.c.b16 %v118, %v117
  %v128 = vpack.c.b16 %v120, %v119
  %v153 = vunpack.c.l.b16 %v41
  %v154 = vunpack.c.l.b16 %v42
  %v155 = vunpack.c.l.b16 %v43
  %v156 = vunpack.c.l.b16 %v44
  %v157 = vunpack.c.l.b16 %v45
  %v158 = vunpack.c.l.b16 %v46
  %v159 = vunpack.c.l.b16 %v47
  %v160 = vunpack.c.l.b16 %v48
  %v161 = vunpack.c.l.b16 %v49
  %v162 = vunpack.c.l.b16 %v50
  %v163 = vunpack.c.l.b16 %v51
  %v164 = vunpack.c.l.b16 %v52
  %v165 = vunpack.c.l.b16 %v53
  %v166 = vunpack.c.l.b16 %v54
  %v167 = vunpack.c.l.b16 %v55
  %v168 = vunpack.c.l.b16 %v56
  %v169 = vpack.c.b16 %v154, %v153
  %v170 = vpack.c.b16 %v156, %v155
  %v171 = vpack.c.b16 %v158, %v157
  %v172 = vpack.c.b16 %v160, %v159
  %v173 = vpack.c.b16 %v162, %v161
  %v174 = vpack.c.b16 %v164, %v163
  %v175 = vpack.c.b16 %v166, %v165
  %v176 = vpack.c.b16 %v168, %v167
  %185 = vmatprep.subr.bf16.mxu0 0
  %186 = vmatpush1.bf16.msra.mxu0 %v176
  %187 = vmatprep.subr.bf16.mxu0 0
  %188 = vmatpush1.bf16.msra.mxu0 %v175
  %189 = vmatprep.subr.bf16.mxu0 0
  %190 = vmatpush1.bf16.msra.mxu0 %v174
  %191 = vmatprep.subr.bf16.mxu0 0
  %192 = vmatpush1.bf16.msra.mxu0 %v173
  %193 = vmatprep.subr.bf16.mxu0 0
  %194 = vmatpush1.bf16.msra.mxu0 %v172
  %195 = vmatprep.subr.bf16.mxu0 0
  %196 = vmatpush1.bf16.msra.mxu0 %v171
  %197 = vmatprep.subr.bf16.mxu0 0
  %198 = vmatpush1.bf16.msra.mxu0 %v170
  %199 = vmatprep.subr.bf16.mxu0 0
  %200 = vmatpush1.bf16.msra.mxu0 %v169
  %201 = vmatprep.subr.bf16.mxu0 0
  %202 = vmatpush2.bf16.msra.mxu0 0
  %203 = vmatprep.subr.bf16.mxu0 0
  %204 = vmatpush2.bf16.msra.mxu0 0
  %205 = vmatprep.subr.bf16.mxu0 0
  %206 = vmatpush2.bf16.msra.mxu0 0
  %207 = vmatprep.subr.bf16.mxu0 0
  %208 = vmatpush2.bf16.msra.mxu0 0
  %209 = vmatprep.subr.bf16.mxu0 0
  %210 = vmatpush2.bf16.msra.mxu0 0
  %211 = vmatprep.subr.bf16.mxu0 0
  %212 = vmatpush2.bf16.msra.mxu0 0
  %213 = vmatprep.subr.bf16.mxu0 0
  %214 = vmatpush2.bf16.msra.mxu0 0
  %215 = vmatprep.subr.bf16.mxu0 0
  %216 = vmatpush2.bf16.msra.mxu0 0
  %217 = vmatprep.mubr.bf16.mxu0 0
  %218 = vmatmul.mubr.bf16.gmra.mxu0 %v121
  %v219 = vpop.f32.mrf.mxu0
  %v220 = vadd.f32 0.0, %v219
  %v221 = vpop.f32.mrf.mxu0
  %v222 = vpop.f32.mrf.mxu0
  %v223 = vadd.f32 0.0, %v222
  %v224 = vpop.f32.mrf.mxu0
  %225 = vmatprep.mubr.bf16.mxu0 0
  %226 = vmatmul.mubr.bf16.gmra.mxu0 %v122
  %v227 = vpop.f32.mrf.mxu0
  %v228 = vadd.f32 0.0, %v227
  %v229 = vpop.f32.mrf.mxu0
  %v230 = vpop.f32.mrf.mxu0
  %v231 = vadd.f32 0.0, %v230
  %v232 = vpop.f32.mrf.mxu0
  %233 = vmatprep.mubr.bf16.mxu0 0
  %234 = vmatmul.mubr.bf16.gmra.mxu0 %v123
  %v235 = vpop.f32.mrf.mxu0
  %v236 = vadd.f32 0.0, %v235
  %v237 = vpop.f32.mrf.mxu0
  %v238 = vpop.f32.mrf.mxu0
  %v239 = vadd.f32 0.0, %v238
  %v240 = vpop.f32.mrf.mxu0
  %241 = vmatprep.mubr.bf16.mxu0 0
  %242 = vmatmul.mubr.bf16.gmra.mxu0 %v124
  %v243 = vpop.f32.mrf.mxu0
  %v244 = vadd.f32 0.0, %v243
  %v245 = vpop.f32.mrf.mxu0
  %v246 = vpop.f32.mrf.mxu0
  %v247 = vadd.f32 0.0, %v246
  %v248 = vpop.f32.mrf.mxu0
  %249 = vmatprep.mubr.bf16.mxu0 0
  %250 = vmatmul.mubr.bf16.gmra.mxu0 %v125
  %v251 = vpop.f32.mrf.mxu0
  %v252 = vadd.f32 0.0, %v251
  %v253 = vpop.f32.mrf.mxu0
  %v254 = vpop.f32.mrf.mxu0
  %v255 = vadd.f32 0.0, %v254
  %v256 = vpop.f32.mrf.mxu0
  %257 = vmatprep.mubr.bf16.mxu0 0
  %258 = vmatmul.mubr.bf16.gmra.mxu0 %v126
  %v259 = vpop.f32.mrf.mxu0
  %v260 = vadd.f32 0.0, %v259
  %v261 = vpop.f32.mrf.mxu0
  %v262 = vpop.f32.mrf.mxu0
  %v263 = vadd.f32 0.0, %v262
  %v264 = vpop.f32.mrf.mxu0
  %265 = vmatprep.mubr.bf16.mxu0 0
  %266 = vmatmul.mubr.bf16.gmra.mxu0 %v127
  %v267 = vpop.f32.mrf.mxu0
  %v268 = vadd.f32 0.0, %v267
  %v269 = vpop.f32.mrf.mxu0
  %v270 = vpop.f32.mrf.mxu0
  %v271 = vadd.f32 0.0, %v270
  %v272 = vpop.f32.mrf.mxu0
  %273 = vmatprep.mubr.bf16.mxu0 0
  %274 = vmatmul.mubr.bf16.gmra.mxu0 %v128
  %v275 = vpop.f32.mrf.mxu0
  %v276 = vadd.f32 0.0, %v275
  %v277 = vpop.f32.mrf.mxu0
  %v278 = vpop.f32.mrf.mxu0
  %v279 = vadd.f32 0.0, %v278
  %v280 = vpop.f32.mrf.mxu0
  %281 = vdwg.mxu0
  %v282 = vadd.f32 %v57, %v220
  %v283 = vadd.f32 %v58, %v223
  %v284 = vadd.f32 %v59, %v228
  %v285 = vadd.f32 %v60, %v231
  %v286 = vadd.f32 %v61, %v236
  %v287 = vadd.f32 %v62, %v239
  %v288 = vadd.f32 %v63, %v244
  %v289 = vadd.f32 %v64, %v247
  %v290 = vadd.f32 %v65, %v252
  %v291 = vadd.f32 %v66, %v255
  %v292 = vadd.f32 %v67, %v260
  %v293 = vadd.f32 %v68, %v263
  %v294 = vadd.f32 %v69, %v268
  %v295 = vadd.f32 %v70, %v271
  %v296 = vadd.f32 %v71, %v276
  %v297 = vadd.f32 %v72, %v279
  %298 = vst [vmem:[%s3] sm:$0xff] %v282
  %299 = vst [vmem:[%s3 + $0x8] sm:$0xff] %v283
  %300 = vst [vmem:[%s3 + $0x10] sm:$0xff] %v284
  %301 = vst [vmem:[%s3 + $0x18] sm:$0xff] %v285
  %302 = vst [vmem:[%s3 + $0x20] sm:$0xff] %v286
  %303 = vst [vmem:[%s3 + $0x28] sm:$0xff] %v287
  %304 = vst [vmem:[%s3 + $0x30] sm:$0xff] %v288
  %305 = vst [vmem:[%s3 + $0x38] sm:$0xff] %v289
  %306 = vst [vmem:[%s3 + $0x40] sm:$0xff] %v290
  %307 = vst [vmem:[%s3 + $0x48] sm:$0xff] %v291
  %308 = vst [vmem:[%s3 + $0x50] sm:$0xff] %v292
  %309 = vst [vmem:[%s3 + $0x58] sm:$0xff] %v293
  %310 = vst [vmem:[%s3 + $0x60] sm:$0xff] %v294
  %311 = vst [vmem:[%s3 + $0x68] sm:$0xff] %v295
  %312 = vst [vmem:[%s3 + $0x70] sm:$0xff] %v296
  %313 = vst [vmem:[%s3 + $0x78] sm:$0xff] %v297
  // Predicated region
  $region18: #{gnn_forward.3} parent=0 // pred_check
    %p314 = pneg %p16
  $region19: #{gnn_forward.3} parent=0 // pred_check_branch
    %316 = sbr.rel (%p314) target = $region21
  $region20: #{gnn_forward.3} parent=0 // pred_region
    %v317 = vld [vmem:[%s3] sm:$0xff]
    %v318 = vld [vmem:[%s3 + $0x8] sm:$0xff]
    %v319 = vld [vmem:[%s3 + $0x10] sm:$0xff]
    %v320 = vld [vmem:[%s3 + $0x18] sm:$0xff]
    %v321 = vld [vmem:[%s3 + $0x20] sm:$0xff]
    %v322 = vld [vmem:[%s3 + $0x28] sm:$0xff]
    %v323 = vld [vmem:[%s3 + $0x30] sm:$0xff]
    %v324 = vld [vmem:[%s3 + $0x38] sm:$0xff]
    %v325 = vld [vmem:[%s3 + $0x40] sm:$0xff]
    %v326 = vld [vmem:[%s3 + $0x48] sm:$0xff]
    %v327 = vld [vmem:[%s3 + $0x50] sm:$0xff]
    %v328 = vld [vmem:[%s3 + $0x58] sm:$0xff]
    %v329 = vld [vmem:[%s3 + $0x60] sm:$0xff]
    %v330 = vld [vmem:[%s3 + $0x68] sm:$0xff]
    %v331 = vld [vmem:[%s3 + $0x70] sm:$0xff]
    %v332 = vld [vmem:[%s3 + $0x78] sm:$0xff]
    %s333 = sld [smem:[#allocation2]]
    %v334 = vstv %s333
    %v335 = vadd.f32 %v317, %v334
    %v336 = vadd.f32 %v318, %v334
    %v337 = vadd.f32 %v319, %v334
    %v338 = vadd.f32 %v320, %v334
    %v339 = vadd.f32 %v321, %v334
    %v340 = vadd.f32 %v322, %v334
    %v341 = vadd.f32 %v323, %v334
    %v342 = vadd.f32 %v324, %v334
    %v343 = vadd.f32 %v325, %v334
    %v344 = vadd.f32 %v326, %v334
    %v345 = vadd.f32 %v327, %v334
    %v346 = vadd.f32 %v328, %v334
    %v347 = vadd.f32 %v329, %v334
    %v348 = vadd.f32 %v330, %v334
    %v349 = vadd.f32 %v331, %v334
    %v350 = vadd.f32 %v332, %v334
    %v351 = vxor.u32 %v335, 2147483648
    %v352 = vxor.u32 %v336, 2147483648
    %v353 = vxor.u32 %v337, 2147483648
    %v354 = vxor.u32 %v338, 2147483648
    %v355 = vxor.u32 %v339, 2147483648
    %v356 = vxor.u32 %v340, 2147483648
    %v357 = vxor.u32 %v341, 2147483648
    %v358 = vxor.u32 %v342, 2147483648
    %v359 = vxor.u32 %v343, 2147483648
    %v360 = vxor.u32 %v344, 2147483648
    %v361 = vxor.u32 %v345, 2147483648
    %v362 = vxor.u32 %v346, 2147483648
    %v363 = vxor.u32 %v347, 2147483648
    %v364 = vxor.u32 %v348, 2147483648
    %v365 = vxor.u32 %v349, 2147483648
    %v366 = vxor.u32 %v350, 2147483648
    %v367 = vmul.f32 %v351, 1.442695
    %v368 = vpow.pop %v367
    %v369 = vmul.f32 %v352, 1.442695
    %v370 = vpow.pop %v369
    %v371 = vmul.f32 %v353, 1.442695
    %v372 = vpow.pop %v371
    %v373 = vmul.f32 %v354, 1.442695
    %v374 = vpow.pop %v373
    %v375 = vmul.f32 %v355, 1.442695
    %v376 = vpow.pop %v375
    %v377 = vmul.f32 %v356, 1.442695
    %v378 = vpow.pop %v377
    %v379 = vmul.f32 %v357, 1.442695
    %v380 = vpow.pop %v379
    %v381 = vmul.f32 %v358, 1.442695
    %v382 = vpow.pop %v381
    %v383 = vmul.f32 %v359, 1.442695
    %v384 = vpow.pop %v383
    %v385 = vmul.f32 %v360, 1.442695
    %v386 = vpow.pop %v385
    %v387 = vmul.f32 %v361, 1.442695
    %v388 = vpow.pop %v387
    %v389 = vmul.f32 %v362, 1.442695
    %v390 = vpow.pop %v389
    %v391 = vmul.f32 %v363, 1.442695
    %v392 = vpow.pop %v391
    %v393 = vmul.f32 %v364, 1.442695
    %v394 = vpow.pop %v393
    %v395 = vmul.f32 %v365, 1.442695
    %v396 = vpow.pop %v395
    %v397 = vmul.f32 %v366, 1.442695
    %v398 = vpow.pop %v397
    %v399 = vadd.f32 %v368, 1.0
    %v400 = vadd.f32 %v370, 1.0
    %v401 = vadd.f32 %v372, 1.0
    %v402 = vadd.f32 %v374, 1.0
    %v403 = vadd.f32 %v376, 1.0
    %v404 = vadd.f32 %v378, 1.0
    %v405 = vadd.f32 %v380, 1.0
    %v406 = vadd.f32 %v382, 1.0
    %v407 = vadd.f32 %v384, 1.0
    %v408 = vadd.f32 %v386, 1.0
    %v409 = vadd.f32 %v388, 1.0
    %v410 = vadd.f32 %v390, 1.0
    %v411 = vadd.f32 %v392, 1.0
    %v412 = vadd.f32 %v394, 1.0
    %v413 = vadd.f32 %v396, 1.0
    %v414 = vadd.f32 %v398, 1.0
    %v415 = vrcp.pop %v399
    %v416 = vmul.f32 1.0, %v415
    %v417 = vrcp.pop %v400
    %v418 = vmul.f32 1.0, %v417
    %v419 = vrcp.pop %v401
    %v420 = vmul.f32 1.0, %v419
    %v421 = vrcp.pop %v402
    %v422 = vmul.f32 1.0, %v421
    %v423 = vrcp.pop %v403
    %v424 = vmul.f32 1.0, %v423
    %v425 = vrcp.pop %v404
    %v426 = vmul.f32 1.0, %v425
    %v427 = vrcp.pop %v405
    %v428 = vmul.f32 1.0, %v427
    %v429 = vrcp.pop %v406
    %v430 = vmul.f32 1.0, %v429
    %v431 = vrcp.pop %v407
    %v432 = vmul.f32 1.0, %v431
    %v433 = vrcp.pop %v408
    %v434 = vmul.f32 1.0, %v433
    %v435 = vrcp.pop %v409
    %v436 = vmul.f32 1.0, %v435
    %v437 = vrcp.pop %v410
    %v438 = vmul.f32 1.0, %v437
    %v439 = vrcp.pop %v411
    %v440 = vmul.f32 1.0, %v439
    %v441 = vrcp.pop %v412
    %v442 = vmul.f32 1.0, %v441
    %v443 = vrcp.pop %v413
    %v444 = vmul.f32 1.0, %v443
    %v445 = vrcp.pop %v414
    %v446 = vmul.f32 1.0, %v445
    %447 = vst [vmem:[%s3] sm:$0xff] %v416
    %448 = vst [vmem:[%s3 + $0x8] sm:$0xff] %v418
    %449 = vst [vmem:[%s3 + $0x10] sm:$0xff] %v420
    %450 = vst [vmem:[%s3 + $0x18] sm:$0xff] %v422
    %451 = vst [vmem:[%s3 + $0x20] sm:$0xff] %v424
    %452 = vst [vmem:[%s3 + $0x28] sm:$0xff] %v426
    %453 = vst [vmem:[%s3 + $0x30] sm:$0xff] %v428
    %454 = vst [vmem:[%s3 + $0x38] sm:$0xff] %v430
    %455 = vst [vmem:[%s3 + $0x40] sm:$0xff] %v432
    %456 = vst [vmem:[%s3 + $0x48] sm:$0xff] %v434
    %457 = vst [vmem:[%s3 + $0x50] sm:$0xff] %v436
    %458 = vst [vmem:[%s3 + $0x58] sm:$0xff] %v438
    %459 = vst [vmem:[%s3 + $0x60] sm:$0xff] %v440
    %460 = vst [vmem:[%s3 + $0x68] sm:$0xff] %v442
    %461 = vst [vmem:[%s3 + $0x70] sm:$0xff] %v444
    %462 = vst [vmem:[%s3 + $0x78] sm:$0xff] %v446
  $region21: #{gnn_forward.3} parent=0 // pred_fallthru
    _
  // Predicated region
  $region22: #{gnn_forward.3} parent=0 // pred_check
    _
  $region23: #{gnn_forward.3} parent=0 // pred_check_branch
    %464 = sbr.rel (0) target = $region25
  $region24: #{gnn_forward.3} parent=0 // pred_region
    _
  $region25: #{gnn_forward.3} parent=0 // pred_fallthru
    _
  // Predicated region
  $region26: #{gnn_forward.3} parent=0 // pred_check
    _
  $region27: #{gnn_forward.3} parent=0 // pred_check_branch
    %466 = sbr.rel (0) target = $region29
  $region28: #{gnn_forward.3} parent=0 // pred_region
    _
  $region29: #{gnn_forward.3} parent=0 // pred_fallthru
    _

// kernel: gnn_forward.2
$region0: #{gnn_forward.2}
  #allocation0 [shape = 'u32[]', space=smem, size = 0x4, offset = 0x4, fixed_abs, tag = 'smem constant byte address 0x4 - core index']
  #allocation1 [shape = 'u32[144,128]{1,0:T(1,128)}', space=vmem, size = 0x12000, scoped, tag = 'internal scratch']
  #allocation2 [shape = 'f32[128,128]{1,0:T(8,128)}', space=vmem, size = 0x10000, scoped, tag = 'scratch operand']
  %s0 = inlined_call_operand.vmem [shape: bf16[128,128], index: 0, kind: input, shape index: {}]
  %s1 = inlined_call_operand.vmem [shape: bf16[128,128], index: 1, kind: input, shape index: {}]
  %s2 = inlined_call_operand.vmem [shape: bf16[128,128], index: 2, kind: input, shape index: {}]
  %s3 = inlined_call_operand.vmem [shape: f32[1,128], index: 3, kind: input, shape index: {}]
  %s4 = inlined_call_operand.vmem [shape: bf16[128,128], index: 4, kind: input, shape index: {}]
  %s5 = inlined_call_operand.vmem [shape: bf16[128,128], index: 5, kind: output, shape index: {}]
  %s6 = sld [smem:[#allocation0]]
  $region38: #{gnn_forward.2} parent=0
    _
  %s8 = ssub.s32 1, %s6
  %s9 = scalar_select 0, %s8, %s6
  // Predicated region
  $region2: #{gnn_forward.2} parent=0 // pred_check
    _
  $region3: #{gnn_forward.2} parent=0 // pred_check_branch
    %11 = sbr.rel (0) target = $region5
  $region4: #{gnn_forward.2} parent=0 // pred_region
    _
  $region5: #{gnn_forward.2} parent=0 // pred_fallthru
    _
  // Predicated region
  $region6: #{gnn_forward.2} parent=0 // pred_check
    _
  $region7: #{gnn_forward.2} parent=0 // pred_check_branch
    %13 = sbr.rel (0) target = $region9
  $region8: #{gnn_forward.2} parent=0 // pred_region
    _
  $region9: #{gnn_forward.2} parent=0 // pred_fallthru
    _
  // Predicated region
  $region10: #{gnn_forward.2} parent=0 // pred_check
    _
  $region11: #{gnn_forward.2} parent=0 // pred_check_branch
    %15 = sbr.rel (0) target = $region13
  $region12: #{gnn_forward.2} parent=0 // pred_region
    _
  $region13: #{gnn_forward.2} parent=0 // pred_fallthru
    _
  // Predicated region
  $region14: #{gnn_forward.2} parent=0 // pred_check
    _
  $region15: #{gnn_forward.2} parent=0 // pred_check_branch
    %17 = sbr.rel (0) target = $region17
  $region16: #{gnn_forward.2} parent=0 // pred_region
    _
  $region17: #{gnn_forward.2} parent=0 // pred_fallthru
    _
  // Predicated region
  $region18: #{gnn_forward.2} parent=0 // pred_check
    _
  $region19: #{gnn_forward.2} parent=0 // pred_check_branch
    %19 = sbr.rel (0) target = $region21
  $region20: #{gnn_forward.2} parent=0 // pred_region
    _
  $region21: #{gnn_forward.2} parent=0 // pred_fallthru
    _
  %p21 = scmp.eq.s32.totalorder 0, 0
  // Predicated region
  $region22: #{gnn_forward.2} parent=0 // pred_check
    %p22 = pneg %p21
  $region23: #{gnn_forward.2} parent=0 // pred_check_branch
    %24 = sbr.rel (%p22) target = $region25
  $region24: #{gnn_forward.2} parent=0 // pred_region
    %25 = vst [vmem:[#allocation2] sm:$0xff] 0.0
    %26 = vst [vmem:[#allocation2 + $0x8] sm:$0xff] 0.0
    %27 = vst [vmem:[#allocation2 + $0x10] sm:$0xff] 0.0
    %28 = vst [vmem:[#allocation2 + $0x18] sm:$0xff] 0.0
    %29 = vst [vmem:[#allocation2 + $0x20] sm:$0xff] 0.0
    %30 = vst [vmem:[#allocation2 + $0x28] sm:$0xff] 0.0
    %31 = vst [vmem:[#allocation2 + $0x30] sm:$0xff] 0.0
    %32 = vst [vmem:[#allocation2 + $0x38] sm:$0xff] 0.0
    %33 = vst [vmem:[#allocation2 + $0x40] sm:$0xff] 0.0
    %34 = vst [vmem:[#allocation2 + $0x48] sm:$0xff] 0.0
    %35 = vst [vmem:[#allocation2 + $0x50] sm:$0xff] 0.0
    %36 = vst [vmem:[#allocation2 + $0x58] sm:$0xff] 0.0
    %37 = vst [vmem:[#allocation2 + $0x60] sm:$0xff] 0.0
    %38 = vst [vmem:[#allocation2 + $0x68] sm:$0xff] 0.0
    %39 = vst [vmem:[#allocation2 + $0x70] sm:$0xff] 0.0
    %40 = vst [vmem:[#allocation2 + $0x78] sm:$0xff] 0.0
  $region25: #{gnn_forward.2} parent=0 // pred_fallthru
    _
  %s41 = smul.u32 0, 128
  %s42 = sshra.s32 %s41, 3
  %s43 = sand.u32 %s41, 7
  %s44 = smul.addr %s42, 4
  %s45 = scalar_lea.vmem %s1, %s44
  %v46 = vld [vmem:[%s45] sm:$0xf]
  %v47 = vld [vmem:[%s45 + $0x4] sm:$0xf]
  %v48 = vld [vmem:[%s45 + $0x8] sm:$0xf]
  %v49 = vld [vmem:[%s45 + $0xc] sm:$0xf]
  %v50 = vld [vmem:[%s45 + $0x10] sm:$0xf]
  %v51 = vld [vmem:[%s45 + $0x14] sm:$0xf]
  %v52 = vld [vmem:[%s45 + $0x18] sm:$0xf]
  %v53 = vld [vmem:[%s45 + $0x1c] sm:$0xf]
  %v54 = vld [vmem:[%s45 + $0x20] sm:$0xf]
  %v55 = vld [vmem:[%s45 + $0x24] sm:$0xf]
  %v56 = vld [vmem:[%s45 + $0x28] sm:$0xf]
  %v57 = vld [vmem:[%s45 + $0x2c] sm:$0xf]
  %v58 = vld [vmem:[%s45 + $0x30] sm:$0xf]
  %v59 = vld [vmem:[%s45 + $0x34] sm:$0xf]
  %v60 = vld [vmem:[%s45 + $0x38] sm:$0xf]
  %v61 = vld [vmem:[%s45 + $0x3c] sm:$0xf]
  %v62 = vld [vmem:[#allocation2] sm:$0xff]
  %v63 = vld [vmem:[#allocation2 + $0x8] sm:$0xff]
  %v64 = vld [vmem:[#allocation2 + $0x10] sm:$0xff]
  %v65 = vld [vmem:[#allocation2 + $0x18] sm:$0xff]
  %v66 = vld [vmem:[#allocation2 + $0x20] sm:$0xff]
  %v67 = vld [vmem:[#allocation2 + $0x28] sm:$0xff]
  %v68 = vld [vmem:[#allocation2 + $0x30] sm:$0xff]
  %v69 = vld [vmem:[#allocation2 + $0x38] sm:$0xff]
  %v70 = vld [vmem:[#allocation2 + $0x40] sm:$0xff]
  %v71 = vld [vmem:[#allocation2 + $0x48] sm:$0xff]
  %v72 = vld [vmem:[#allocation2 + $0x50] sm:$0xff]
  %v73 = vld [vmem:[#allocation2 + $0x58] sm:$0xff]
  %v74 = vld [vmem:[#allocation2 + $0x60] sm:$0xff]
  %v75 = vld [vmem:[#allocation2 + $0x68] sm:$0xff]
  %v76 = vld [vmem:[#allocation2 + $0x70] sm:$0xff]
  %v77 = vld [vmem:[#allocation2 + $0x78] sm:$0xff]
  %v78 = vld [vmem:[%s0] sm:$0xf]
  %v79 = vld [vmem:[%s0 + $0x4] sm:$0xf]
  %v80 = vld [vmem:[%s0 + $0x8] sm:$0xf]
  %v81 = vld [vmem:[%s0 + $0xc] sm:$0xf]
  %v82 = vld [vmem:[%s0 + $0x10] sm:$0xf]
  %v83 = vld [vmem:[%s0 + $0x14] sm:$0xf]
  %v84 = vld [vmem:[%s0 + $0x18] sm:$0xf]
  %v85 = vld [vmem:[%s0 + $0x1c] sm:$0xf]
  %v86 = vld [vmem:[%s0 + $0x20] sm:$0xf]
  %v87 = vld [vmem:[%s0 + $0x24] sm:$0xf]
  %v88 = vld [vmem:[%s0 + $0x28] sm:$0xf]
  %v89 = vld [vmem:[%s0 + $0x2c] sm:$0xf]
  %v90 = vld [vmem:[%s0 + $0x30] sm:$0xf]
  %v91 = vld [vmem:[%s0 + $0x34] sm:$0xf]
  %v92 = vld [vmem:[%s0 + $0x38] sm:$0xf]
  %v93 = vld [vmem:[%s0 + $0x3c] sm:$0xf]
  %v110 = vunpack.c.l.b16 %v78
  %v111 = vunpack.c.l.b16 %v79
  %v112 = vunpack.c.l.b16 %v80
  %v113 = vunpack.c.l.b16 %v81
  %v114 = vunpack.c.l.b16 %v82
  %v115 = vunpack.c.l.b16 %v83
  %v116 = vunpack.c.l.b16 %v84
  %v117 = vunpack.c.l.b16 %v85
  %v118 = vunpack.c.l.b16 %v86
  %v119 = vunpack.c.l.b16 %v87
  %v120 = vunpack.c.l.b16 %v88
  %v121 = vunpack.c.l.b16 %v89
  %v122 = vunpack.c.l.b16 %v90
  %v123 = vunpack.c.l.b16 %v91
  %v124 = vunpack.c.l.b16 %v92
  %v125 = vunpack.c.l.b16 %v93
  %v126 = vpack.c.b16 %v111, %v110
  %v127 = vpack.c.b16 %v113, %v112
  %v128 = vpack.c.b16 %v115, %v114
  %v129 = vpack.c.b16 %v117, %v116
  %v130 = vpack.c.b16 %v119, %v118
  %v131 = vpack.c.b16 %v121, %v120
  %v132 = vpack.c.b16 %v123, %v122
  %v133 = vpack.c.b16 %v125, %v124
  %v158 = vunpack.c.l.b16 %v46
  %v159 = vunpack.c.l.b16 %v47
  %v160 = vunpack.c.l.b16 %v48
  %v161 = vunpack.c.l.b16 %v49
  %v162 = vunpack.c.l.b16 %v50
  %v163 = vunpack.c.l.b16 %v51
  %v164 = vunpack.c.l.b16 %v52
  %v165 = vunpack.c.l.b16 %v53
  %v166 = vunpack.c.l.b16 %v54
  %v167 = vunpack.c.l.b16 %v55
  %v168 = vunpack.c.l.b16 %v56
  %v169 = vunpack.c.l.b16 %v57
  %v170 = vunpack.c.l.b16 %v58
  %v171 = vunpack.c.l.b16 %v59
  %v172 = vunpack.c.l.b16 %v60
  %v173 = vunpack.c.l.b16 %v61
  %v174 = vpack.c.b16 %v159, %v158
  %v175 = vpack.c.b16 %v161, %v160
  %v176 = vpack.c.b16 %v163, %v162
  %v177 = vpack.c.b16 %v165, %v164
  %v178 = vpack.c.b16 %v167, %v166
  %v179 = vpack.c.b16 %v169, %v168
  %v180 = vpack.c.b16 %v171, %v170
  %v181 = vpack.c.b16 %v173, %v172
  %190 = vmatprep.subr.bf16.mxu0 0
  %191 = vmatpush1.bf16.msra.mxu0 %v181
  %192 = vmatprep.subr.bf16.mxu0 0
  %193 = vmatpush1.bf16.msra.mxu0 %v180
  %194 = vmatprep.subr.bf16.mxu0 0
  %195 = vmatpush1.bf16.msra.mxu0 %v179
  %196 = vmatprep.subr.bf16.mxu0 0
  %197 = vmatpush1.bf16.msra.mxu0 %v178
  %198 = vmatprep.subr.bf16.mxu0 0
  %199 = vmatpush1.bf16.msra.mxu0 %v177
  %200 = vmatprep.subr.bf16.mxu0 0
  %201 = vmatpush1.bf16.msra.mxu0 %v176
  %202 = vmatprep.subr.bf16.mxu0 0
  %203 = vmatpush1.bf16.msra.mxu0 %v175
  %204 = vmatprep.subr.bf16.mxu0 0
  %205 = vmatpush1.bf16.msra.mxu0 %v174
  %206 = vmatprep.subr.bf16.mxu0 0
  %207 = vmatpush2.bf16.msra.mxu0 0
  %208 = vmatprep.subr.bf16.mxu0 0
  %209 = vmatpush2.bf16.msra.mxu0 0
  %210 = vmatprep.subr.bf16.mxu0 0
  %211 = vmatpush2.bf16.msra.mxu0 0
  %212 = vmatprep.subr.bf16.mxu0 0
  %213 = vmatpush2.bf16.msra.mxu0 0
  %214 = vmatprep.subr.bf16.mxu0 0
  %215 = vmatpush2.bf16.msra.mxu0 0
  %216 = vmatprep.subr.bf16.mxu0 0
  %217 = vmatpush2.bf16.msra.mxu0 0
  %218 = vmatprep.subr.bf16.mxu0 0
  %219 = vmatpush2.bf16.msra.mxu0 0
  %220 = vmatprep.subr.bf16.mxu0 0
  %221 = vmatpush2.bf16.msra.mxu0 0
  %222 = vmatprep.mubr.bf16.mxu0 0
  %223 = vmatmul.mubr.bf16.gmra.mxu0 %v126
  %v224 = vpop.f32.mrf.mxu0
  %v225 = vadd.f32 0.0, %v224
  %v226 = vpop.f32.mrf.mxu0
  %v227 = vpop.f32.mrf.mxu0
  %v228 = vadd.f32 0.0, %v227
  %v229 = vpop.f32.mrf.mxu0
  %230 = vmatprep.mubr.bf16.mxu0 0
  %231 = vmatmul.mubr.bf16.gmra.mxu0 %v127
  %v232 = vpop.f32.mrf.mxu0
  %v233 = vadd.f32 0.0, %v232
  %v234 = vpop.f32.mrf.mxu0
  %v235 = vpop.f32.mrf.mxu0
  %v236 = vadd.f32 0.0, %v235
  %v237 = vpop.f32.mrf.mxu0
  %238 = vmatprep.mubr.bf16.mxu0 0
  %239 = vmatmul.mubr.bf16.gmra.mxu0 %v128
  %v240 = vpop.f32.mrf.mxu0
  %v241 = vadd.f32 0.0, %v240
  %v242 = vpop.f32.mrf.mxu0
  %v243 = vpop.f32.mrf.mxu0
  %v244 = vadd.f32 0.0, %v243
  %v245 = vpop.f32.mrf.mxu0
  %246 = vmatprep.mubr.bf16.mxu0 0
  %247 = vmatmul.mubr.bf16.gmra.mxu0 %v129
  %v248 = vpop.f32.mrf.mxu0
  %v249 = vadd.f32 0.0, %v248
  %v250 = vpop.f32.mrf.mxu0
  %v251 = vpop.f32.mrf.mxu0
  %v252 = vadd.f32 0.0, %v251
  %v253 = vpop.f32.mrf.mxu0
  %254 = vmatprep.mubr.bf16.mxu0 0
  %255 = vmatmul.mubr.bf16.gmra.mxu0 %v130
  %v256 = vpop.f32.mrf.mxu0
  %v257 = vadd.f32 0.0, %v256
  %v258 = vpop.f32.mrf.mxu0
  %v259 = vpop.f32.mrf.mxu0
  %v260 = vadd.f32 0.0, %v259
  %v261 = vpop.f32.mrf.mxu0
  %262 = vmatprep.mubr.bf16.mxu0 0
  %263 = vmatmul.mubr.bf16.gmra.mxu0 %v131
  %v264 = vpop.f32.mrf.mxu0
  %v265 = vadd.f32 0.0, %v264
  %v266 = vpop.f32.mrf.mxu0
  %v267 = vpop.f32.mrf.mxu0
  %v268 = vadd.f32 0.0, %v267
  %v269 = vpop.f32.mrf.mxu0
  %270 = vmatprep.mubr.bf16.mxu0 0
  %271 = vmatmul.mubr.bf16.gmra.mxu0 %v132
  %v272 = vpop.f32.mrf.mxu0
  %v273 = vadd.f32 0.0, %v272
  %v274 = vpop.f32.mrf.mxu0
  %v275 = vpop.f32.mrf.mxu0
  %v276 = vadd.f32 0.0, %v275
  %v277 = vpop.f32.mrf.mxu0
  %278 = vmatprep.mubr.bf16.mxu0 0
  %279 = vmatmul.mubr.bf16.gmra.mxu0 %v133
  %v280 = vpop.f32.mrf.mxu0
  %v281 = vadd.f32 0.0, %v280
  %v282 = vpop.f32.mrf.mxu0
  %v283 = vpop.f32.mrf.mxu0
  %v284 = vadd.f32 0.0, %v283
  %v285 = vpop.f32.mrf.mxu0
  %286 = vdwg.mxu0
  %v287 = vadd.f32 %v62, %v225
  %v288 = vadd.f32 %v63, %v228
  %v289 = vadd.f32 %v64, %v233
  %v290 = vadd.f32 %v65, %v236
  %v291 = vadd.f32 %v66, %v241
  %v292 = vadd.f32 %v67, %v244
  %v293 = vadd.f32 %v68, %v249
  %v294 = vadd.f32 %v69, %v252
  %v295 = vadd.f32 %v70, %v257
  %v296 = vadd.f32 %v71, %v260
  %v297 = vadd.f32 %v72, %v265
  %v298 = vadd.f32 %v73, %v268
  %v299 = vadd.f32 %v74, %v273
  %v300 = vadd.f32 %v75, %v276
  %v301 = vadd.f32 %v76, %v281
  %v302 = vadd.f32 %v77, %v284
  %303 = vst [vmem:[#allocation2] sm:$0xff] %v287
  %304 = vst [vmem:[#allocation2 + $0x8] sm:$0xff] %v288
  %305 = vst [vmem:[#allocation2 + $0x10] sm:$0xff] %v289
  %306 = vst [vmem:[#allocation2 + $0x18] sm:$0xff] %v290
  %307 = vst [vmem:[#allocation2 + $0x20] sm:$0xff] %v291
  %308 = vst [vmem:[#allocation2 + $0x28] sm:$0xff] %v292
  %309 = vst [vmem:[#allocation2 + $0x30] sm:$0xff] %v293
  %310 = vst [vmem:[#allocation2 + $0x38] sm:$0xff] %v294
  %311 = vst [vmem:[#allocation2 + $0x40] sm:$0xff] %v295
  %312 = vst [vmem:[#allocation2 + $0x48] sm:$0xff] %v296
  %313 = vst [vmem:[#allocation2 + $0x50] sm:$0xff] %v297
  %314 = vst [vmem:[#allocation2 + $0x58] sm:$0xff] %v298
  %315 = vst [vmem:[#allocation2 + $0x60] sm:$0xff] %v299
  %316 = vst [vmem:[#allocation2 + $0x68] sm:$0xff] %v300
  %317 = vst [vmem:[#allocation2 + $0x70] sm:$0xff] %v301
  %318 = vst [vmem:[#allocation2 + $0x78] sm:$0xff] %v302
  // Predicated region
  $region26: #{gnn_forward.2} parent=0 // pred_check
    %p319 = pneg %p21
  $region27: #{gnn_forward.2} parent=0 // pred_check_branch
    %321 = sbr.rel (%p319) target = $region29
  $region28: #{gnn_forward.2} parent=0 // pred_region
    %v322 = vld [vmem:[#allocation2] sm:$0xff]
    %v323 = vld [vmem:[#allocation2 + $0x8] sm:$0xff]
    %v324 = vld [vmem:[#allocation2 + $0x10] sm:$0xff]
    %v325 = vld [vmem:[#allocation2 + $0x18] sm:$0xff]
    %v326 = vld [vmem:[#allocation2 + $0x20] sm:$0xff]
    %v327 = vld [vmem:[#allocation2 + $0x28] sm:$0xff]
    %v328 = vld [vmem:[#allocation2 + $0x30] sm:$0xff]
    %v329 = vld [vmem:[#allocation2 + $0x38] sm:$0xff]
    %v330 = vld [vmem:[#allocation2 + $0x40] sm:$0xff]
    %v331 = vld [vmem:[#allocation2 + $0x48] sm:$0xff]
    %v332 = vld [vmem:[#allocation2 + $0x50] sm:$0xff]
    %v333 = vld [vmem:[#allocation2 + $0x58] sm:$0xff]
    %v334 = vld [vmem:[#allocation2 + $0x60] sm:$0xff]
    %v335 = vld [vmem:[#allocation2 + $0x68] sm:$0xff]
    %v336 = vld [vmem:[#allocation2 + $0x70] sm:$0xff]
    %v337 = vld [vmem:[#allocation2 + $0x78] sm:$0xff]
    %v338 = vpack.c.bf16 %v323, %v322
    %v339 = vpack.c.bf16 %v325, %v324
    %v340 = vpack.c.bf16 %v327, %v326
    %v341 = vpack.c.bf16 %v329, %v328
    %v342 = vpack.c.bf16 %v331, %v330
    %v343 = vpack.c.bf16 %v333, %v332
    %v344 = vpack.c.bf16 %v335, %v334
    %v345 = vpack.c.bf16 %v337, %v336
    %v346 = vld [vmem:[%s2] sm:$0xf]
    %v347 = vld [vmem:[%s2 + $0x4] sm:$0xf]
    %v348 = vld [vmem:[%s2 + $0x8] sm:$0xf]
    %v349 = vld [vmem:[%s2 + $0xc] sm:$0xf]
    %v350 = vld [vmem:[%s2 + $0x10] sm:$0xf]
    %v351 = vld [vmem:[%s2 + $0x14] sm:$0xf]
    %v352 = vld [vmem:[%s2 + $0x18] sm:$0xf]
    %v353 = vld [vmem:[%s2 + $0x1c] sm:$0xf]
    %v354 = vld [vmem:[%s2 + $0x20] sm:$0xf]
    %v355 = vld [vmem:[%s2 + $0x24] sm:$0xf]
    %v356 = vld [vmem:[%s2 + $0x28] sm:$0xf]
    %v357 = vld [vmem:[%s2 + $0x2c] sm:$0xf]
    %v358 = vld [vmem:[%s2 + $0x30] sm:$0xf]
    %v359 = vld [vmem:[%s2 + $0x34] sm:$0xf]
    %v360 = vld [vmem:[%s2 + $0x38] sm:$0xf]
    %v361 = vld [vmem:[%s2 + $0x3c] sm:$0xf]
    %v362 = vld [vmem:[%s3] sm:$0x1]
    %v364 = vlaneseq
    %v365 = vshrl.u32 %v364, 7
    %v366 = vsub.s32 0, %v365
    %v367 = vrot.slane %v362, %v366
    %v385 = vunpack.c.l.b16 %v346
    %v386 = vunpack.c.l.b16 %v347
    %v387 = vunpack.c.l.b16 %v348
    %v388 = vunpack.c.l.b16 %v349
    %v389 = vunpack.c.l.b16 %v350
    %v390 = vunpack.c.l.b16 %v351
    %v391 = vunpack.c.l.b16 %v352
    %v392 = vunpack.c.l.b16 %v353
    %v393 = vunpack.c.l.b16 %v354
    %v394 = vunpack.c.l.b16 %v355
    %v395 = vunpack.c.l.b16 %v356
    %v396 = vunpack.c.l.b16 %v357
    %v397 = vunpack.c.l.b16 %v358
    %v398 = vunpack.c.l.b16 %v359
    %v399 = vunpack.c.l.b16 %v360
    %v400 = vunpack.c.l.b16 %v361
    %v401 = vpack.c.b16 %v386, %v385
    %v402 = vpack.c.b16 %v388, %v387
    %v403 = vpack.c.b16 %v390, %v389
    %v404 = vpack.c.b16 %v392, %v391
    %v405 = vpack.c.b16 %v394, %v393
    %v406 = vpack.c.b16 %v396, %v395
    %v407 = vpack.c.b16 %v398, %v397
    %v408 = vpack.c.b16 %v400, %v399
    %417 = vmatprep.subr.bf16.mxu0 0
    %418 = vmatpush1.bf16.msra.mxu0 %v408
    %419 = vmatprep.subr.bf16.mxu0 0
    %420 = vmatpush1.bf16.msra.mxu0 %v407
    %421 = vmatprep.subr.bf16.mxu0 0
    %422 = vmatpush1.bf16.msra.mxu0 %v406
    %423 = vmatprep.subr.bf16.mxu0 0
    %424 = vmatpush1.bf16.msra.mxu0 %v405
    %425 = vmatprep.subr.bf16.mxu0 0
    %426 = vmatpush1.bf16.msra.mxu0 %v404
    %427 = vmatprep.subr.bf16.mxu0 0
    %428 = vmatpush1.bf16.msra.mxu0 %v403
    %429 = vmatprep.subr.bf16.mxu0 0
    %430 = vmatpush1.bf16.msra.mxu0 %v402
    %431 = vmatprep.subr.bf16.mxu0 0
    %432 = vmatpush1.bf16.msra.mxu0 %v401
    %433 = vmatprep.subr.bf16.mxu0 0
    %434 = vmatpush2.bf16.msra.mxu0 0
    %435 = vmatprep.subr.bf16.mxu0 0
    %436 = vmatpush2.bf16.msra.mxu0 0
    %437 = vmatprep.subr.bf16.mxu0 0
    %438 = vmatpush2.bf16.msra.mxu0 0
    %439 = vmatprep.subr.bf16.mxu0 0
    %440 = vmatpush2.bf16.msra.mxu0 0
    %441 = vmatprep.subr.bf16.mxu0 0
    %442 = vmatpush2.bf16.msra.mxu0 0
    %443 = vmatprep.subr.bf16.mxu0 0
    %444 = vmatpush2.bf16.msra.mxu0 0
    %445 = vmatprep.subr.bf16.mxu0 0
    %446 = vmatpush2.bf16.msra.mxu0 0
    %447 = vmatprep.subr.bf16.mxu0 0
    %448 = vmatpush2.bf16.msra.mxu0 0
    %449 = vmatprep.mubr.bf16.mxu0 0
    %450 = vmatmul.mubr.bf16.gmra.mxu0 %v338
    %v451 = vpop.f32.mrf.mxu0
    %v452 = vadd.f32 %v367, %v451
    %v453 = vpop.f32.mrf.mxu0
    %v454 = vpop.f32.mrf.mxu0
    %v455 = vadd.f32 %v367, %v454
    %v456 = vpop.f32.mrf.mxu0
    %457 = vmatprep.mubr.bf16.mxu0 0
    %458 = vmatmul.mubr.bf16.gmra.mxu0 %v339
    %v459 = vpop.f32.mrf.mxu0
    %v460 = vadd.f32 %v367, %v459
    %v461 = vpop.f32.mrf.mxu0
    %v462 = vpop.f32.mrf.mxu0
    %v463 = vadd.f32 %v367, %v462
    %v464 = vpop.f32.mrf.mxu0
    %465 = vmatprep.mubr.bf16.mxu0 0
    %466 = vmatmul.mubr.bf16.gmra.mxu0 %v340
    %v467 = vpop.f32.mrf.mxu0
    %v468 = vadd.f32 %v367, %v467
    %v469 = vpop.f32.mrf.mxu0
    %v470 = vpop.f32.mrf.mxu0
    %v471 = vadd.f32 %v367, %v470
    %v472 = vpop.f32.mrf.mxu0
    %473 = vmatprep.mubr.bf16.mxu0 0
    %474 = vmatmul.mubr.bf16.gmra.mxu0 %v341
    %v475 = vpop.f32.mrf.mxu0
    %v476 = vadd.f32 %v367, %v475
    %v477 = vpop.f32.mrf.mxu0
    %v478 = vpop.f32.mrf.mxu0
    %v479 = vadd.f32 %v367, %v478
    %v480 = vpop.f32.mrf.mxu0
    %481 = vmatprep.mubr.bf16.mxu0 0
    %482 = vmatmul.mubr.bf16.gmra.mxu0 %v342
    %v483 = vpop.f32.mrf.mxu0
    %v484 = vadd.f32 %v367, %v483
    %v485 = vpop.f32.mrf.mxu0
    %v486 = vpop.f32.mrf.mxu0
    %v487 = vadd.f32 %v367, %v486
    %v488 = vpop.f32.mrf.mxu0
    %489 = vmatprep.mubr.bf16.mxu0 0
    %490 = vmatmul.mubr.bf16.gmra.mxu0 %v343
    %v491 = vpop.f32.mrf.mxu0
    %v492 = vadd.f32 %v367, %v491
    %v493 = vpop.f32.mrf.mxu0
    %v494 = vpop.f32.mrf.mxu0
    %v495 = vadd.f32 %v367, %v494
    %v496 = vpop.f32.mrf.mxu0
    %497 = vmatprep.mubr.bf16.mxu0 0
    %498 = vmatmul.mubr.bf16.gmra.mxu0 %v344
    %v499 = vpop.f32.mrf.mxu0
    %v500 = vadd.f32 %v367, %v499
    %v501 = vpop.f32.mrf.mxu0
    %v502 = vpop.f32.mrf.mxu0
    %v503 = vadd.f32 %v367, %v502
    %v504 = vpop.f32.mrf.mxu0
    %505 = vmatprep.mubr.bf16.mxu0 0
    %506 = vmatmul.mubr.bf16.gmra.mxu0 %v345
    %v507 = vpop.f32.mrf.mxu0
    %v508 = vadd.f32 %v367, %v507
    %v509 = vpop.f32.mrf.mxu0
    %v510 = vpop.f32.mrf.mxu0
    %v511 = vadd.f32 %v367, %v510
    %v512 = vpop.f32.mrf.mxu0
    %513 = vdwg.mxu0
    %v514 = vmax.f32 %v452, 0.0
    %v515 = vmax.f32 %v455, 0.0
    %v516 = vmax.f32 %v460, 0.0
    %v517 = vmax.f32 %v463, 0.0
    %v518 = vmax.f32 %v468, 0.0
    %v519 = vmax.f32 %v471, 0.0
    %v520 = vmax.f32 %v476, 0.0
    %v521 = vmax.f32 %v479, 0.0
    %v522 = vmax.f32 %v484, 0.0
    %v523 = vmax.f32 %v487, 0.0
    %v524 = vmax.f32 %v492, 0.0
    %v525 = vmax.f32 %v495, 0.0
    %v526 = vmax.f32 %v500, 0.0
    %v527 = vmax.f32 %v503, 0.0
    %v528 = vmax.f32 %v508, 0.0
    %v529 = vmax.f32 %v511, 0.0
    %v530 = vpack.c.bf16 %v515, %v514
    %v531 = vpack.c.bf16 %v517, %v516
    %v532 = vpack.c.bf16 %v519, %v518
    %v533 = vpack.c.bf16 %v521, %v520
    %v534 = vpack.c.bf16 %v523, %v522
    %v535 = vpack.c.bf16 %v525, %v524
    %v536 = vpack.c.bf16 %v527, %v526
    %v537 = vpack.c.bf16 %v529, %v528
    %v538 = vld [vmem:[%s4] sm:$0xf]
    %v539 = vld [vmem:[%s4 + $0x4] sm:$0xf]
    %v540 = vld [vmem:[%s4 + $0x8] sm:$0xf]
    %v541 = vld [vmem:[%s4 + $0xc] sm:$0xf]
    %v542 = vld [vmem:[%s4 + $0x10] sm:$0xf]
    %v543 = vld [vmem:[%s4 + $0x14] sm:$0xf]
    %v544 = vld [vmem:[%s4 + $0x18] sm:$0xf]
    %v545 = vld [vmem:[%s4 + $0x1c] sm:$0xf]
    %v546 = vld [vmem:[%s4 + $0x20] sm:$0xf]
    %v547 = vld [vmem:[%s4 + $0x24] sm:$0xf]
    %v548 = vld [vmem:[%s4 + $0x28] sm:$0xf]
    %v549 = vld [vmem:[%s4 + $0x2c] sm:$0xf]
    %v550 = vld [vmem:[%s4 + $0x30] sm:$0xf]
    %v551 = vld [vmem:[%s4 + $0x34] sm:$0xf]
    %v552 = vld [vmem:[%s4 + $0x38] sm:$0xf]
    %v553 = vld [vmem:[%s4 + $0x3c] sm:$0xf]
    %v570 = vunpack.c.l.b16 %v538
    %v571 = vunpack.c.l.b16 %v539
    %v572 = vunpack.c.l.b16 %v540
    %v573 = vunpack.c.l.b16 %v541
    %v574 = vunpack.c.l.b16 %v542
    %v575 = vunpack.c.l.b16 %v543
    %v576 = vunpack.c.l.b16 %v544
    %v577 = vunpack.c.l.b16 %v545
    %v578 = vunpack.c.l.b16 %v546
    %v579 = vunpack.c.l.b16 %v547
    %v580 = vunpack.c.l.b16 %v548
    %v581 = vunpack.c.l.b16 %v549
    %v582 = vunpack.c.l.b16 %v550
    %v583 = vunpack.c.l.b16 %v551
    %v584 = vunpack.c.l.b16 %v552
    %v585 = vunpack.c.l.b16 %v553
    %v586 = vpack.c.b16 %v571, %v570
    %v587 = vpack.c.b16 %v573, %v572
    %v588 = vpack.c.b16 %v575, %v574
    %v589 = vpack.c.b16 %v577, %v576
    %v590 = vpack.c.b16 %v579, %v578
    %v591 = vpack.c.b16 %v581, %v580
    %v592 = vpack.c.b16 %v583, %v582
    %v593 = vpack.c.b16 %v585, %v584
    %602 = vmatprep.subr.bf16.mxu0 0
    %603 = vmatpush1.bf16.msra.mxu0 %v593
    %604 = vmatprep.subr.bf16.mxu0 0
    %605 = vmatpush1.bf16.msra.mxu0 %v592
    %606 = vmatprep.subr.bf16.mxu0 0
    %607 = vmatpush1.bf16.msra.mxu0 %v591
    %608 = vmatprep.subr.bf16.mxu0 0
    %609 = vmatpush1.bf16.msra.mxu0 %v590
    %610 = vmatprep.subr.bf16.mxu0 0
    %611 = vmatpush1.bf16.msra.mxu0 %v589
    %612 = vmatprep.subr.bf16.mxu0 0
    %613 = vmatpush1.bf16.msra.mxu0 %v588
    %614 = vmatprep.subr.bf16.mxu0 0
    %615 = vmatpush1.bf16.msra.mxu0 %v587
    %616 = vmatprep.subr.bf16.mxu0 0
    %617 = vmatpush1.bf16.msra.mxu0 %v586
    %618 = vmatprep.subr.bf16.mxu0 0
    %619 = vmatpush2.bf16.msra.mxu0 0
    %620 = vmatprep.subr.bf16.mxu0 0
    %621 = vmatpush2.bf16.msra.mxu0 0
    %622 = vmatprep.subr.bf16.mxu0 0
    %623 = vmatpush2.bf16.msra.mxu0 0
    %624 = vmatprep.subr.bf16.mxu0 0
    %625 = vmatpush2.bf16.msra.mxu0 0
    %626 = vmatprep.subr.bf16.mxu0 0
    %627 = vmatpush2.bf16.msra.mxu0 0
    %628 = vmatprep.subr.bf16.mxu0 0
    %629 = vmatpush2.bf16.msra.mxu0 0
    %630 = vmatprep.subr.bf16.mxu0 0
    %631 = vmatpush2.bf16.msra.mxu0 0
    %632 = vmatprep.subr.bf16.mxu0 0
    %633 = vmatpush2.bf16.msra.mxu0 0
    %634 = vmatprep.mubr.bf16.mxu0 0
    %635 = vmatmul.mubr.bf16.gmra.mxu0 %v530
    %v636 = vpop.f32.mrf.mxu0
    %v637 = vadd.f32 0.0, %v636
    %v638 = vpop.f32.mrf.mxu0
    %v639 = vpop.f32.mrf.mxu0
    %v640 = vadd.f32 0.0, %v639
    %v641 = vpop.f32.mrf.mxu0
    %642 = vmatprep.mubr.bf16.mxu0 0
    %643 = vmatmul.mubr.bf16.gmra.mxu0 %v531
    %v644 = vpop.f32.mrf.mxu0
    %v645 = vadd.f32 0.0, %v644
    %v646 = vpop.f32.mrf.mxu0
    %v647 = vpop.f32.mrf.mxu0
    %v648 = vadd.f32 0.0, %v647
    %v649 = vpop.f32.mrf.mxu0
    %650 = vmatprep.mubr.bf16.mxu0 0
    %651 = vmatmul.mubr.bf16.gmra.mxu0 %v532
    %v652 = vpop.f32.mrf.mxu0
    %v653 = vadd.f32 0.0, %v652
    %v654 = vpop.f32.mrf.mxu0
    %v655 = vpop.f32.mrf.mxu0
    %v656 = vadd.f32 0.0, %v655
    %v657 = vpop.f32.mrf.mxu0
    %658 = vmatprep.mubr.bf16.mxu0 0
    %659 = vmatmul.mubr.bf16.gmra.mxu0 %v533
    %v660 = vpop.f32.mrf.mxu0
    %v661 = vadd.f32 0.0, %v660
    %v662 = vpop.f32.mrf.mxu0
    %v663 = vpop.f32.mrf.mxu0
    %v664 = vadd.f32 0.0, %v663
    %v665 = vpop.f32.mrf.mxu0
    %666 = vmatprep.mubr.bf16.mxu0 0
    %667 = vmatmul.mubr.bf16.gmra.mxu0 %v534
    %v668 = vpop.f32.mrf.mxu0
    %v669 = vadd.f32 0.0, %v668
    %v670 = vpop.f32.mrf.mxu0
    %v671 = vpop.f32.mrf.mxu0
    %v672 = vadd.f32 0.0, %v671
    %v673 = vpop.f32.mrf.mxu0
    %674 = vmatprep.mubr.bf16.mxu0 0
    %675 = vmatmul.mubr.bf16.gmra.mxu0 %v535
    %v676 = vpop.f32.mrf.mxu0
    %v677 = vadd.f32 0.0, %v676
    %v678 = vpop.f32.mrf.mxu0
    %v679 = vpop.f32.mrf.mxu0
    %v680 = vadd.f32 0.0, %v679
    %v681 = vpop.f32.mrf.mxu0
    %682 = vmatprep.mubr.bf16.mxu0 0
    %683 = vmatmul.mubr.bf16.gmra.mxu0 %v536
    %v684 = vpop.f32.mrf.mxu0
    %v685 = vadd.f32 0.0, %v684
    %v686 = vpop.f32.mrf.mxu0
    %v687 = vpop.f32.mrf.mxu0
    %v688 = vadd.f32 0.0, %v687
    %v689 = vpop.f32.mrf.mxu0
    %690 = vmatprep.mubr.bf16.mxu0 0
    %691 = vmatmul.mubr.bf16.gmra.mxu0 %v537
    %v692 = vpop.f32.mrf.mxu0
    %v693 = vadd.f32 0.0, %v692
    %v694 = vpop.f32.mrf.mxu0
    %v695 = vpop.f32.mrf.mxu0
    %v696 = vadd.f32 0.0, %v695
    %v697 = vpop.f32.mrf.mxu0
    %698 = vdwg.mxu0
    %v699 = vpack.c.bf16 %v640, %v637
    %v700 = vpack.c.bf16 %v648, %v645
    %v701 = vpack.c.bf16 %v656, %v653
    %v702 = vpack.c.bf16 %v664, %v661
    %v703 = vpack.c.bf16 %v672, %v669
    %v704 = vpack.c.bf16 %v680, %v677
    %v705 = vpack.c.bf16 %v688, %v685
    %v706 = vpack.c.bf16 %v696, %v693
    %v715 = vunpack.c.l.b16 %v699
    %v716 = vunpack.c.h.b16 %v699
    %v717 = vunpack.c.l.b16 %v700
    %v718 = vunpack.c.h.b16 %v700
    %v719 = vunpack.c.l.b16 %v701
    %v720 = vunpack.c.h.b16 %v701
    %v721 = vunpack.c.l.b16 %v702
    %v722 = vunpack.c.h.b16 %v702
    %v723 = vunpack.c.l.b16 %v703
    %v724 = vunpack.c.h.b16 %v703
    %v725 = vunpack.c.l.b16 %v704
    %v726 = vunpack.c.h.b16 %v704
    %v727 = vunpack.c.l.b16 %v705
    %v728 = vunpack.c.h.b16 %v705
    %v729 = vunpack.c.l.b16 %v706
    %v730 = vunpack.c.h.b16 %v706
    %v731 = vpack.c.b16 %v715, %v715
    %v732 = vpack.c.b16 %v716, %v716
    %v733 = vpack.c.b16 %v717, %v717
    %v734 = vpack.c.b16 %v718, %v718
    %v735 = vpack.c.b16 %v719, %v719
    %v736 = vpack.c.b16 %v720, %v720
    %v737 = vpack.c.b16 %v721, %v721
    %v738 = vpack.c.b16 %v722, %v722
    %v739 = vpack.c.b16 %v723, %v723
    %v740 = vpack.c.b16 %v724, %v724
    %v741 = vpack.c.b16 %v725, %v725
    %v742 = vpack.c.b16 %v726, %v726
    %v743 = vpack.c.b16 %v727, %v727
    %v744 = vpack.c.b16 %v728, %v728
    %v745 = vpack.c.b16 %v729, %v729
    %v746 = vpack.c.b16 %v730, %v730
    %763 = vst [vmem:[%s5] sm:$0xf] %v731
    %764 = vst [vmem:[%s5 + $0x4] sm:$0xf] %v732
    %765 = vst [vmem:[%s5 + $0x8] sm:$0xf] %v733
    %766 = vst [vmem:[%s5 + $0xc] sm:$0xf] %v734
    %767 = vst [vmem:[%s5 + $0x10] sm:$0xf] %v735
    %768 = vst [vmem:[%s5 + $0x14] sm:$0xf] %v736
    %769 = vst [vmem:[%s5 + $0x18] sm:$0xf] %v737
    %770 = vst [vmem:[%s5 + $0x1c] sm:$0xf] %v738
    %771 = vst [vmem:[%s5 + $0x20] sm:$0xf] %v739
    %772 = vst [vmem:[%s5 + $0x24] sm:$0xf] %v740
    %773 = vst [vmem:[%s5 + $0x28] sm:$0xf] %v741
    %774 = vst [vmem:[%s5 + $0x2c] sm:$0xf] %v742
    %775 = vst [vmem:[%s5 + $0x30] sm:$0xf] %v743
    %776 = vst [vmem:[%s5 + $0x34] sm:$0xf] %v744
    %777 = vst [vmem:[%s5 + $0x38] sm:$0xf] %v745
    %778 = vst [vmem:[%s5 + $0x3c] sm:$0xf] %v746
  $region29: #{gnn_forward.2} parent=0 // pred_fallthru
    _
  // Predicated region
  $region30: #{gnn_forward.2} parent=0 // pred_check
    _
  $region31: #{gnn_forward.2} parent=0 // pred_check_branch
    %780 = sbr.rel (0) target = $region33
  $region32: #{gnn_forward.2} parent=0 // pred_region
    _
  $region33: #{gnn_forward.2} parent=0 // pred_fallthru
    _
  // Predicated region
  $region34: #{gnn_forward.2} parent=0 // pred_check
    _
  $region35: #{gnn_forward.2} parent=0 // pred_check_branch
    %782 = sbr.rel (0) target = $region37
  $region36: #{gnn_forward.2} parent=0 // pred_region
    _
  $region37: #{gnn_forward.2} parent=0 // pred_fallthru
    _

</llo_original>
